<compile_context>
chip_gen: v6e
topology: v6e:2x2x1
jax: 0.10.0
libtpu: 0.0.40
codegen_flags: <defaults>
</compile_context>

<pallas_src>
import jax
import jax.numpy as jnp
import numpy as np
from jax import lax
from jax.experimental import pallas as pl
from jax.experimental.pallas import tpu as pltpu

HIDDEN = 32
NUM_LAYERS = 2
NUM_CLASSES = 10


def simple_lstm_kernel(x_ref, h0_ref, c0_ref, wih0_ref, wh_ref, b01_ref,
                       wfc_ref, bfc_ref,
                       out_ref, hn_ref, cn_ref,
                       xp_scr, h1_scr):
    H = HIDDEN
    S = x_ref.shape[0]

    # ---- Hoisted, time-independent layer-0 input projection (+ fused bias). ----
    xp_scr[...] = (
        jnp.dot(x_ref[...], wih0_ref[...], preferred_element_type=jnp.float32)
        + b01_ref[0:1, :])

    # Packed recurrent weights, loaded once outside the recurrence:
    #   rows [0:H)  = W_hh0^T                 -> layer-0 recurrent matmul
    #   rows [H:3H) = [W_ih1^T ; W_hh1^T]     -> layer-1 fused matmul (single dot)
    whh0 = wh_ref[0:H, :]            # (H, 4H)
    wrec1 = wh_ref[H:3 * H, :]       # (2H, 4H)
    b1 = b01_ref[1:2, :]

    # PyTorch gate order i, f, g, o -> the tanh gate g occupies lanes [2H, 3H).
    lane = lax.broadcasted_iota(jnp.int32, (1, 4 * H), 1)
    g_span = (lane >= 2 * H) & (lane < 3 * H)

    def activate(gates):
        # Single EUP pass over the whole (1, 4H) row:
        #   sigmoid(x) = 0.5 * tanh(x / 2) + 0.5  on the i/f/o lanes,
        #   tanh(x)                               on the g lanes.
        t = jnp.tanh(jnp.where(g_span, gates, 0.5 * gates))
        return jnp.where(g_span, t, 0.5 * t + 0.5)

    def cell_update(acts, c):
        i = acts[:, 0:H]
        f = acts[:, H:2 * H]
        g = acts[:, 2 * H:3 * H]
        o = acts[:, 3 * H:4 * H]
        c_new = f * c + i * g
        h_new = o * jnp.tanh(c_new)
        return h_new, c_new

    def step(t, carry):
        h0, c0, h1, c1 = carry
        # Layer 0: x-projection precomputed; only the recurrent matmul remains.
        g0 = xp_scr[pl.ds(t, 1), :] + jnp.dot(
            h0, whh0, preferred_element_type=jnp.float32)
        h0n, c0n = cell_update(activate(g0), c0)
        # Layer 1: ONE fused (1, 2H) @ (2H, 4H) matmul (LHS = [h0n | h1] lane concat).
        lhs1 = jnp.concatenate([h0n, h1], axis=1)
        g1 = jnp.dot(lhs1, wrec1, preferred_element_type=jnp.float32) + b1
        h1n, c1n = cell_update(activate(g1), c1)
        # Stage this step's layer-1 output for the post-loop batched FC.
        h1_scr[pl.ds(t, 1), :] = h1n
        return h0n, c0n, h1n, c1n

    init = (h0_ref[0:1, :], c0_ref[0:1, :], h0_ref[1:2, :], c0_ref[1:2, :])
    h0f, c0f, h1f, c1f = lax.fori_loop(0, S, step, init, unroll=True)

    # Final hidden / cell states written once (not per step).
    hn_ref[0:1, :] = h0f
    hn_ref[1:2, :] = h1f
    cn_ref[0:1, :] = c0f
    cn_ref[1:2, :] = c1f

    # ---- fc1 + LogSoftmax(dim=1), hoisted out of the recurrence. ----
    logits = jnp.dot(h1_scr[...], wfc_ref[...],
                     preferred_element_type=jnp.float32) + bfc_ref[...]
    m = jnp.max(logits, axis=-1, keepdims=True)
    z = logits - m
    lse = jnp.log(jnp.sum(jnp.exp(z), axis=-1, keepdims=True))
    out_ref[...] = z - lse


def simple_lstm_forward(x, h0, c0, params):
    seq_len, _ = x.shape
    H = HIDDEN

    # Wrapper-side packing: recurrent-weight slab, fused-bias slab.
    wh = jnp.concatenate(
        [params["whh0_t"], params["wih1_t"], params["whh1_t"]], axis=0)   # (3H, 4H)
    b01 = jnp.concatenate(
        [params["bih0"] + params["bhh0"],
         params["bih1"] + params["bhh1"]], axis=0)                        # (2, 4H)

    out_shape = (
        jax.ShapeDtypeStruct((seq_len, NUM_CLASSES), jnp.float32),
        jax.ShapeDtypeStruct((NUM_LAYERS, H), jnp.float32),
        jax.ShapeDtypeStruct((NUM_LAYERS, H), jnp.float32),
    )

    vmem = lambda: pl.BlockSpec(memory_space=pltpu.MemorySpace.VMEM)

    return pl.pallas_call(
        simple_lstm_kernel,
        out_shape=out_shape,
        in_specs=[vmem() for _ in range(8)],       # whole arrays, single DMA each
        out_specs=tuple(vmem() for _ in range(3)),
        scratch_shapes=[
            pltpu.VMEM((seq_len, 4 * H), jnp.float32),   # hoisted x-projection
            pltpu.VMEM((seq_len, H), jnp.float32),       # per-step h1 staging
        ],
    )(x, h0, c0, params["wih0_t"], wh, b01, params["wfc_t"], params["bfc"])


def init_params(key, input_size, H=HIDDEN, num_classes=NUM_CLASSES):
    # PyTorch default init: U(-1/sqrt(H), 1/sqrt(H)) for LSTM and Linear(H, 10).
    k = 1.0 / np.sqrt(H)
    ks = jax.random.split(key, 10)
    u = lambda kk, shape: jax.random.uniform(kk, shape, jnp.float32, -k, k)
    return dict(
        wih0_t=u(ks[0], (input_size, 4 * H)),
        whh0_t=u(ks[1], (H, 4 * H)),
        bih0=u(ks[2], (1, 4 * H)),
        bhh0=u(ks[3], (1, 4 * H)),
        wih1_t=u(ks[4], (H, 4 * H)),
        whh1_t=u(ks[5], (H, 4 * H)),
        bih1=u(ks[6], (1, 4 * H)),
        bhh1=u(ks[7], (1, 4 * H)),
        wfc_t=u(ks[8], (H, num_classes)),
        bfc=u(ks[9], (1, num_classes)),
    )


def ref_forward(x, h0, c0, p):
    """Pure-JAX reference (matches PyTorch nn.LSTM unbatched semantics)."""
    H = HIDDEN

    def cell(x_v, h_v, c_v, wih_t, whh_t, bih, bhh):
        g = x_v @ wih_t + h_v @ whh_t + bih[0] + bhh[0]
        i = jax.nn.sigmoid(g[0:H])
        f = jax.nn.sigmoid(g[H:2 * H])
        gg = jnp.tanh(g[2 * H:3 * H])
        o = jax.nn.sigmoid(g[3 * H:4 * H])
        c_new = f * c_v + i * gg
        h_new = o * jnp.tanh(c_new)
        return h_new, c_new

    def step(carry, x_t):
        h, c = carry
        h0n, c0n = cell(x_t, h[0], c[0], p["wih0_t"], p["whh0_t"],
                        p["bih0"], p["bhh0"])
        h1n, c1n = cell(h0n, h[1], c[1], p["wih1_t"], p["whh1_t"],
                        p["bih1"], p["bhh1"])
        logits = h1n @ p["wfc_t"] + p["bfc"][0]
        zl = logits - jnp.max(logits)
        logp = zl - jnp.log(jnp.sum(jnp.exp(zl)))
        return (jnp.stack([h0n, h1n]), jnp.stack([c0n, c1n])), logp

    (hn, cn), out = lax.scan(step, (h0, c0), x)
    return out, hn, cn


if __name__ == "__main__":
    key = jax.random.PRNGKey(0)
    k1, k2, k3, kp = jax.random.split(key, 4)

    seq_len = 8
    batch_size = 1      # module's LSTM input size is batch_size * vocab_size
    vocab_size = 57     # ascii_letters + " .,;'" (name-classification alphabet)
    input_size = batch_size * vocab_size

    x = jax.random.normal(k1, (seq_len, input_size), jnp.float32)
    h0 = jax.random.normal(k2, (NUM_LAYERS, HIDDEN), jnp.float32)
    c0 = jax.random.normal(k3, (NUM_LAYERS, HIDDEN), jnp.float32)
    params = init_params(kp, input_size)

    out, hn, cn = simple_lstm_forward(x, h0, c0, params)
    jax.block_until_ready((out, hn, cn))

    out_r, hn_r, cn_r = ref_forward(x, h0, c0, params)
    assert np.allclose(np.asarray(out), np.asarray(out_r), atol=1e-5, rtol=1e-4)
    assert np.allclose(np.asarray(hn), np.asarray(hn_r), atol=1e-5, rtol=1e-4)
    assert np.allclose(np.asarray(cn), np.asarray(cn_r), atol=1e-5, rtol=1e-4)

    print("KERNEL_OK")
</pallas_src>

<mosaic_0001>
module attributes {stable_mosaic.version = 11 : i64} {
  func.func @simple_lstm_kernel(%arg0: memref<8x57xf32, #tpu.memory_space<vmem>>, %arg1: memref<2x32xf32, #tpu.memory_space<vmem>>, %arg2: memref<2x32xf32, #tpu.memory_space<vmem>>, %arg3: memref<57x128xf32, #tpu.memory_space<vmem>>, %arg4: memref<96x128xf32, #tpu.memory_space<vmem>>, %arg5: memref<2x128xf32, #tpu.memory_space<vmem>>, %arg6: memref<32x10xf32, #tpu.memory_space<vmem>>, %arg7: memref<1x10xf32, #tpu.memory_space<vmem>>, %arg8: memref<8x10xf32, #tpu.memory_space<vmem>>, %arg9: memref<2x32xf32, #tpu.memory_space<vmem>>, %arg10: memref<2x32xf32, #tpu.memory_space<vmem>>, %arg11: memref<8x128xf32, #tpu.memory_space<vmem>>, %arg12: memref<8x32xf32, #tpu.memory_space<vmem>>) attributes {dimension_semantics = [], scalar_prefetch = 0 : i64, scratch_operands = 2 : i64, tpu.core_type = #tpu.core_type<tc>} {
    %c0 = arith.constant 0 : index
    %c0_0 = arith.constant 0 : index
    %0 = vector.load %arg0[%c0, %c0_0] : memref<8x57xf32, #tpu.memory_space<vmem>>, vector<8x57xf32>
    %c0_1 = arith.constant 0 : index
    %c0_2 = arith.constant 0 : index
    %1 = vector.load %arg3[%c0_1, %c0_2] : memref<57x128xf32, #tpu.memory_space<vmem>>, vector<57x128xf32>
    %cst = arith.constant dense<0.000000e+00> : vector<8x128xf32>
    %2 = tpu.matmul %0, %1, %cst {dimension_numbers = #tpu.dot_dimension_numbers<[1], [0], [0], [1], [0, 0, 1, 1], [], []>} : vector<8x57xf32>, vector<57x128xf32>, vector<8x128xf32> -> vector<8x128xf32>
    %c0_3 = arith.constant 0 : index
    %c0_4 = arith.constant 0 : index
    %3 = vector.load %arg5[%c0_3, %c0_4] : memref<2x128xf32, #tpu.memory_space<vmem>>, vector<1x128xf32>
    %4 = vector.broadcast %3 : vector<1x128xf32> to vector<8x128xf32>
    %5 = arith.addf %2, %4 : vector<8x128xf32>
    %c0_5 = arith.constant 0 : index
    %c0_6 = arith.constant 0 : index
    %6 = vector.load %arg11[%c0_5, %c0_6] : memref<8x128xf32, #tpu.memory_space<vmem>>, vector<8x128xf32>
    tpu.vector_store %arg11[%c0_5, %c0_6], %5 {strides = array<i32>} : memref<8x128xf32, #tpu.memory_space<vmem>>, vector<8x128xf32>,
    %c0_7 = arith.constant 0 : index
    %c0_8 = arith.constant 0 : index
    %7 = vector.load %arg4[%c0_7, %c0_8] : memref<96x128xf32, #tpu.memory_space<vmem>>, vector<32x128xf32>
    %c32 = arith.constant 32 : index
    %c0_9 = arith.constant 0 : index
    %8 = vector.load %arg4[%c32, %c0_9] : memref<96x128xf32, #tpu.memory_space<vmem>>, vector<64x128xf32>
    %c1 = arith.constant 1 : index
    %c0_10 = arith.constant 0 : index
    %9 = vector.load %arg5[%c1, %c0_10] : memref<2x128xf32, #tpu.memory_space<vmem>>, vector<1x128xf32>
    %10 = tpu.iota {dimensions = array<i32: 1>} : vector<1x128xi32>
    %c64_i32 = arith.constant 64 : i32
    %11 = vector.broadcast %c64_i32 : i32 to vector<1x128xi32>
    %12 = arith.cmpi sge, %10, %11 : vector<1x128xi32>
    %c96_i32 = arith.constant 96 : i32
    %13 = vector.broadcast %c96_i32 : i32 to vector<1x128xi32>
    %14 = arith.cmpi slt, %10, %13 : vector<1x128xi32>
    %15 = arith.andi %12, %14 : vector<1x128xi1>
    %c0_11 = arith.constant 0 : index
    %c0_12 = arith.constant 0 : index
    %16 = vector.load %arg1[%c0_11, %c0_12] : memref<2x32xf32, #tpu.memory_space<vmem>>, vector<1x32xf32>
    %c0_13 = arith.constant 0 : index
    %c0_14 = arith.constant 0 : index
    %17 = vector.load %arg2[%c0_13, %c0_14] : memref<2x32xf32, #tpu.memory_space<vmem>>, vector<1x32xf32>
    %c1_15 = arith.constant 1 : index
    %c0_16 = arith.constant 0 : index
    %18 = vector.load %arg1[%c1_15, %c0_16] : memref<2x32xf32, #tpu.memory_space<vmem>>, vector<1x32xf32>
    %c1_17 = arith.constant 1 : index
    %c0_18 = arith.constant 0 : index
    %19 = vector.load %arg2[%c1_17, %c0_18] : memref<2x32xf32, #tpu.memory_space<vmem>>, vector<1x32xf32>
    %c0_i32 = arith.constant 0 : i32
    %20 = arith.index_cast %c0_i32 : i32 to index
    %c0_19 = arith.constant 0 : index
    %21 = vector.load %arg11[%20, %c0_19] : memref<8x128xf32, #tpu.memory_space<vmem>>, vector<1x128xf32>
    %cst_20 = arith.constant dense<0.000000e+00> : vector<1x128xf32>
    %22 = tpu.matmul %16, %7, %cst_20 {dimension_numbers = #tpu.dot_dimension_numbers<[1], [0], [0], [1], [0, 0, 1, 1], [], []>} : vector<1x32xf32>, vector<32x128xf32>, vector<1x128xf32> -> vector<1x128xf32>
    %23 = arith.addf %21, %22 : vector<1x128xf32>
    %cst_21 = arith.constant 5.000000e-01 : f32
    %24 = vector.broadcast %cst_21 : f32 to vector<1x128xf32>
    %25 = arith.mulf %24, %23 : vector<1x128xf32>
    %26 = arith.select %15, %23, %25 : vector<1x128xi1>, vector<1x128xf32>
    %27 = math.tanh %26 : vector<1x128xf32>
    %cst_22 = arith.constant 5.000000e-01 : f32
    %28 = vector.broadcast %cst_22 : f32 to vector<1x128xf32>
    %29 = arith.mulf %28, %27 : vector<1x128xf32>
    %cst_23 = arith.constant 5.000000e-01 : f32
    %30 = vector.broadcast %cst_23 : f32 to vector<1x128xf32>
    %31 = arith.addf %29, %30 : vector<1x128xf32>
    %32 = arith.select %15, %27, %31 : vector<1x128xi1>, vector<1x128xf32>
    %33 = vector.extract_strided_slice %32 {offsets = [0, 0], sizes = [1, 32], strides = [1, 1]} : vector<1x128xf32> to vector<1x32xf32>
    %34 = vector.extract_strided_slice %32 {offsets = [0, 32], sizes = [1, 32], strides = [1, 1]} : vector<1x128xf32> to vector<1x32xf32>
    %35 = vector.extract_strided_slice %32 {offsets = [0, 64], sizes = [1, 32], strides = [1, 1]} : vector<1x128xf32> to vector<1x32xf32>
    %36 = vector.extract_strided_slice %32 {offsets = [0, 96], sizes = [1, 32], strides = [1, 1]} : vector<1x128xf32> to vector<1x32xf32>
    %37 = arith.mulf %34, %17 : vector<1x32xf32>
    %38 = arith.mulf %33, %35 : vector<1x32xf32>
    %39 = arith.addf %37, %38 : vector<1x32xf32>
    %40 = math.tanh %39 : vector<1x32xf32>
    %41 = arith.mulf %36, %40 : vector<1x32xf32>
    %42 = tpu.concatenate %41, %18 in 1 : vector<1x32xf32>, vector<1x32xf32> -> vector<1x64xf32>
    %cst_24 = arith.constant dense<0.000000e+00> : vector<1x128xf32>
    %43 = tpu.matmul %42, %8, %cst_24 {dimension_numbers = #tpu.dot_dimension_numbers<[1], [0], [0], [1], [0, 0, 1, 1], [], []>} : vector<1x64xf32>, vector<64x128xf32>, vector<1x128xf32> -> vector<1x128xf32>
    %44 = arith.addf %43, %9 : vector<1x128xf32>
    %cst_25 = arith.constant 5.000000e-01 : f32
    %45 = vector.broadcast %cst_25 : f32 to vector<1x128xf32>
    %46 = arith.mulf %45, %44 : vector<1x128xf32>
    %47 = arith.select %15, %44, %46 : vector<1x128xi1>, vector<1x128xf32>
    %48 = math.tanh %47 : vector<1x128xf32>
    %cst_26 = arith.constant 5.000000e-01 : f32
    %49 = vector.broadcast %cst_26 : f32 to vector<1x128xf32>
    %50 = arith.mulf %49, %48 : vector<1x128xf32>
    %cst_27 = arith.constant 5.000000e-01 : f32
    %51 = vector.broadcast %cst_27 : f32 to vector<1x128xf32>
    %52 = arith.addf %50, %51 : vector<1x128xf32>
    %53 = arith.select %15, %48, %52 : vector<1x128xi1>, vector<1x128xf32>
    %54 = vector.extract_strided_slice %53 {offsets = [0, 0], sizes = [1, 32], strides = [1, 1]} : vector<1x128xf32> to vector<1x32xf32>
    %55 = vector.extract_strided_slice %53 {offsets = [0, 32], sizes = [1, 32], strides = [1, 1]} : vector<1x128xf32> to vector<1x32xf32>
    %56 = vector.extract_strided_slice %53 {offsets = [0, 64], sizes = [1, 32], strides = [1, 1]} : vector<1x128xf32> to vector<1x32xf32>
    %57 = vector.extract_strided_slice %53 {offsets = [0, 96], sizes = [1, 32], strides = [1, 1]} : vector<1x128xf32> to vector<1x32xf32>
    %58 = arith.mulf %55, %19 : vector<1x32xf32>
    %59 = arith.mulf %54, %56 : vector<1x32xf32>
    %60 = arith.addf %58, %59 : vector<1x32xf32>
    %61 = math.tanh %60 : vector<1x32xf32>
    %62 = arith.mulf %57, %61 : vector<1x32xf32>
    %63 = arith.index_cast %c0_i32 : i32 to index
    %c0_28 = arith.constant 0 : index
    %64 = vector.load %arg12[%63, %c0_28] : memref<8x32xf32, #tpu.memory_space<vmem>>, vector<1x32xf32>
    tpu.vector_store %arg12[%63, %c0_28], %62 {strides = array<i32>} : memref<8x32xf32, #tpu.memory_space<vmem>>, vector<1x32xf32>,
    %c1_i32 = arith.constant 1 : i32
    %65 = arith.index_cast %c1_i32 : i32 to index
    %c0_29 = arith.constant 0 : index
    %66 = vector.load %arg11[%65, %c0_29] : memref<8x128xf32, #tpu.memory_space<vmem>>, vector<1x128xf32>
    %cst_30 = arith.constant dense<0.000000e+00> : vector<1x128xf32>
    %67 = tpu.matmul %41, %7, %cst_30 {dimension_numbers = #tpu.dot_dimension_numbers<[1], [0], [0], [1], [0, 0, 1, 1], [], []>} : vector<1x32xf32>, vector<32x128xf32>, vector<1x128xf32> -> vector<1x128xf32>
    %68 = arith.addf %66, %67 : vector<1x128xf32>
    %cst_31 = arith.constant 5.000000e-01 : f32
    %69 = vector.broadcast %cst_31 : f32 to vector<1x128xf32>
    %70 = arith.mulf %69, %68 : vector<1x128xf32>
    %71 = arith.select %15, %68, %70 : vector<1x128xi1>, vector<1x128xf32>
    %72 = math.tanh %71 : vector<1x128xf32>
    %cst_32 = arith.constant 5.000000e-01 : f32
    %73 = vector.broadcast %cst_32 : f32 to vector<1x128xf32>
    %74 = arith.mulf %73, %72 : vector<1x128xf32>
    %cst_33 = arith.constant 5.000000e-01 : f32
    %75 = vector.broadcast %cst_33 : f32 to vector<1x128xf32>
    %76 = arith.addf %74, %75 : vector<1x128xf32>
    %77 = arith.select %15, %72, %76 : vector<1x128xi1>, vector<1x128xf32>
    %78 = vector.extract_strided_slice %77 {offsets = [0, 0], sizes = [1, 32], strides = [1, 1]} : vector<1x128xf32> to vector<1x32xf32>
    %79 = vector.extract_strided_slice %77 {offsets = [0, 32], sizes = [1, 32], strides = [1, 1]} : vector<1x128xf32> to vector<1x32xf32>
    %80 = vector.extract_strided_slice %77 {offsets = [0, 64], sizes = [1, 32], strides = [1, 1]} : vector<1x128xf32> to vector<1x32xf32>
    %81 = vector.extract_strided_slice %77 {offsets = [0, 96], sizes = [1, 32], strides = [1, 1]} : vector<1x128xf32> to vector<1x32xf32>
    %82 = arith.mulf %79, %39 : vector<1x32xf32>
    %83 = arith.mulf %78, %80 : vector<1x32xf32>
    %84 = arith.addf %82, %83 : vector<1x32xf32>
    %85 = math.tanh %84 : vector<1x32xf32>
    %86 = arith.mulf %81, %85 : vector<1x32xf32>
    %87 = tpu.concatenate %86, %62 in 1 : vector<1x32xf32>, vector<1x32xf32> -> vector<1x64xf32>
    %cst_34 = arith.constant dense<0.000000e+00> : vector<1x128xf32>
    %88 = tpu.matmul %87, %8, %cst_34 {dimension_numbers = #tpu.dot_dimension_numbers<[1], [0], [0], [1], [0, 0, 1, 1], [], []>} : vector<1x64xf32>, vector<64x128xf32>, vector<1x128xf32> -> vector<1x128xf32>
    %89 = arith.addf %88, %9 : vector<1x128xf32>
    %cst_35 = arith.constant 5.000000e-01 : f32
    %90 = vector.broadcast %cst_35 : f32 to vector<1x128xf32>
    %91 = arith.mulf %90, %89 : vector<1x128xf32>
    %92 = arith.select %15, %89, %91 : vector<1x128xi1>, vector<1x128xf32>
    %93 = math.tanh %92 : vector<1x128xf32>
    %cst_36 = arith.constant 5.000000e-01 : f32
    %94 = vector.broadcast %cst_36 : f32 to vector<1x128xf32>
    %95 = arith.mulf %94, %93 : vector<1x128xf32>
    %cst_37 = arith.constant 5.000000e-01 : f32
    %96 = vector.broadcast %cst_37 : f32 to vector<1x128xf32>
    %97 = arith.addf %95, %96 : vector<1x128xf32>
    %98 = arith.select %15, %93, %97 : vector<1x128xi1>, vector<1x128xf32>
    %99 = vector.extract_strided_slice %98 {offsets = [0, 0], sizes = [1, 32], strides = [1, 1]} : vector<1x128xf32> to vector<1x32xf32>
    %100 = vector.extract_strided_slice %98 {offsets = [0, 32], sizes = [1, 32], strides = [1, 1]} : vector<1x128xf32> to vector<1x32xf32>
    %101 = vector.extract_strided_slice %98 {offsets = [0, 64], sizes = [1, 32], strides = [1, 1]} : vector<1x128xf32> to vector<1x32xf32>
    %102 = vector.extract_strided_slice %98 {offsets = [0, 96], sizes = [1, 32], strides = [1, 1]} : vector<1x128xf32> to vector<1x32xf32>
    %103 = arith.mulf %100, %60 : vector<1x32xf32>
    %104 = arith.mulf %99, %101 : vector<1x32xf32>
    %105 = arith.addf %103, %104 : vector<1x32xf32>
    %106 = math.tanh %105 : vector<1x32xf32>
    %107 = arith.mulf %102, %106 : vector<1x32xf32>
    %108 = arith.index_cast %c1_i32 : i32 to index
    %c0_38 = arith.constant 0 : index
    %109 = vector.load %arg12[%108, %c0_38] : memref<8x32xf32, #tpu.memory_space<vmem>>, vector<1x32xf32>
    tpu.vector_store %arg12[%108, %c0_38], %107 {strides = array<i32>} : memref<8x32xf32, #tpu.memory_space<vmem>>, vector<1x32xf32>,
    %c2_i32 = arith.constant 2 : i32
    %110 = arith.index_cast %c2_i32 : i32 to index
    %c0_39 = arith.constant 0 : index
    %111 = vector.load %arg11[%110, %c0_39] : memref<8x128xf32, #tpu.memory_space<vmem>>, vector<1x128xf32>
    %cst_40 = arith.constant dense<0.000000e+00> : vector<1x128xf32>
    %112 = tpu.matmul %86, %7, %cst_40 {dimension_numbers = #tpu.dot_dimension_numbers<[1], [0], [0], [1], [0, 0, 1, 1], [], []>} : vector<1x32xf32>, vector<32x128xf32>, vector<1x128xf32> -> vector<1x128xf32>
    %113 = arith.addf %111, %112 : vector<1x128xf32>
    %cst_41 = arith.constant 5.000000e-01 : f32
    %114 = vector.broadcast %cst_41 : f32 to vector<1x128xf32>
    %115 = arith.mulf %114, %113 : vector<1x128xf32>
    %116 = arith.select %15, %113, %115 : vector<1x128xi1>, vector<1x128xf32>
    %117 = math.tanh %116 : vector<1x128xf32>
    %cst_42 = arith.constant 5.000000e-01 : f32
    %118 = vector.broadcast %cst_42 : f32 to vector<1x128xf32>
    %119 = arith.mulf %118, %117 : vector<1x128xf32>
    %cst_43 = arith.constant 5.000000e-01 : f32
    %120 = vector.broadcast %cst_43 : f32 to vector<1x128xf32>
    %121 = arith.addf %119, %120 : vector<1x128xf32>
    %122 = arith.select %15, %117, %121 : vector<1x128xi1>, vector<1x128xf32>
    %123 = vector.extract_strided_slice %122 {offsets = [0, 0], sizes = [1, 32], strides = [1, 1]} : vector<1x128xf32> to vector<1x32xf32>
    %124 = vector.extract_strided_slice %122 {offsets = [0, 32], sizes = [1, 32], strides = [1, 1]} : vector<1x128xf32> to vector<1x32xf32>
    %125 = vector.extract_strided_slice %122 {offsets = [0, 64], sizes = [1, 32], strides = [1, 1]} : vector<1x128xf32> to vector<1x32xf32>
    %126 = vector.extract_strided_slice %122 {offsets = [0, 96], sizes = [1, 32], strides = [1, 1]} : vector<1x128xf32> to vector<1x32xf32>
    %127 = arith.mulf %124, %84 : vector<1x32xf32>
    %128 = arith.mulf %123, %125 : vector<1x32xf32>
    %129 = arith.addf %127, %128 : vector<1x32xf32>
    %130 = math.tanh %129 : vector<1x32xf32>
    %131 = arith.mulf %126, %130 : vector<1x32xf32>
    %132 = tpu.concatenate %131, %107 in 1 : vector<1x32xf32>, vector<1x32xf32> -> vector<1x64xf32>
    %cst_44 = arith.constant dense<0.000000e+00> : vector<1x128xf32>
    %133 = tpu.matmul %132, %8, %cst_44 {dimension_numbers = #tpu.dot_dimension_numbers<[1], [0], [0], [1], [0, 0, 1, 1], [], []>} : vector<1x64xf32>, vector<64x128xf32>, vector<1x128xf32> -> vector<1x128xf32>
    %134 = arith.addf %133, %9 : vector<1x128xf32>
    %cst_45 = arith.constant 5.000000e-01 : f32
    %135 = vector.broadcast %cst_45 : f32 to vector<1x128xf32>
    %136 = arith.mulf %135, %134 : vector<1x128xf32>
    %137 = arith.select %15, %134, %136 : vector<1x128xi1>, vector<1x128xf32>
    %138 = math.tanh %137 : vector<1x128xf32>
    %cst_46 = arith.constant 5.000000e-01 : f32
    %139 = vector.broadcast %cst_46 : f32 to vector<1x128xf32>
    %140 = arith.mulf %139, %138 : vector<1x128xf32>
    %cst_47 = arith.constant 5.000000e-01 : f32
    %141 = vector.broadcast %cst_47 : f32 to vector<1x128xf32>
    %142 = arith.addf %140, %141 : vector<1x128xf32>
    %143 = arith.select %15, %138, %142 : vector<1x128xi1>, vector<1x128xf32>
    %144 = vector.extract_strided_slice %143 {offsets = [0, 0], sizes = [1, 32], strides = [1, 1]} : vector<1x128xf32> to vector<1x32xf32>
    %145 = vector.extract_strided_slice %143 {offsets = [0, 32], sizes = [1, 32], strides = [1, 1]} : vector<1x128xf32> to vector<1x32xf32>
    %146 = vector.extract_strided_slice %143 {offsets = [0, 64], sizes = [1, 32], strides = [1, 1]} : vector<1x128xf32> to vector<1x32xf32>
    %147 = vector.extract_strided_slice %143 {offsets = [0, 96], sizes = [1, 32], strides = [1, 1]} : vector<1x128xf32> to vector<1x32xf32>
    %148 = arith.mulf %145, %105 : vector<1x32xf32>
    %149 = arith.mulf %144, %146 : vector<1x32xf32>
    %150 = arith.addf %148, %149 : vector<1x32xf32>
    %151 = math.tanh %150 : vector<1x32xf32>
    %152 = arith.mulf %147, %151 : vector<1x32xf32>
    %153 = arith.index_cast %c2_i32 : i32 to index
    %c0_48 = arith.constant 0 : index
    %154 = vector.load %arg12[%153, %c0_48] : memref<8x32xf32, #tpu.memory_space<vmem>>, vector<1x32xf32>
    tpu.vector_store %arg12[%153, %c0_48], %152 {strides = array<i32>} : memref<8x32xf32, #tpu.memory_space<vmem>>, vector<1x32xf32>,
    %c3_i32 = arith.constant 3 : i32
    %155 = arith.index_cast %c3_i32 : i32 to index
    %c0_49 = arith.constant 0 : index
    %156 = vector.load %arg11[%155, %c0_49] : memref<8x128xf32, #tpu.memory_space<vmem>>, vector<1x128xf32>
    %cst_50 = arith.constant dense<0.000000e+00> : vector<1x128xf32>
    %157 = tpu.matmul %131, %7, %cst_50 {dimension_numbers = #tpu.dot_dimension_numbers<[1], [0], [0], [1], [0, 0, 1, 1], [], []>} : vector<1x32xf32>, vector<32x128xf32>, vector<1x128xf32> -> vector<1x128xf32>
    %158 = arith.addf %156, %157 : vector<1x128xf32>
    %cst_51 = arith.constant 5.000000e-01 : f32
    %159 = vector.broadcast %cst_51 : f32 to vector<1x128xf32>
    %160 = arith.mulf %159, %158 : vector<1x128xf32>
    %161 = arith.select %15, %158, %160 : vector<1x128xi1>, vector<1x128xf32>
    %162 = math.tanh %161 : vector<1x128xf32>
    %cst_52 = arith.constant 5.000000e-01 : f32
    %163 = vector.broadcast %cst_52 : f32 to vector<1x128xf32>
    %164 = arith.mulf %163, %162 : vector<1x128xf32>
    %cst_53 = arith.constant 5.000000e-01 : f32
    %165 = vector.broadcast %cst_53 : f32 to vector<1x128xf32>
    %166 = arith.addf %164, %165 : vector<1x128xf32>
    %167 = arith.select %15, %162, %166 : vector<1x128xi1>, vector<1x128xf32>
    %168 = vector.extract_strided_slice %167 {offsets = [0, 0], sizes = [1, 32], strides = [1, 1]} : vector<1x128xf32> to vector<1x32xf32>
    %169 = vector.extract_strided_slice %167 {offsets = [0, 32], sizes = [1, 32], strides = [1, 1]} : vector<1x128xf32> to vector<1x32xf32>
    %170 = vector.extract_strided_slice %167 {offsets = [0, 64], sizes = [1, 32], strides = [1, 1]} : vector<1x128xf32> to vector<1x32xf32>
    %171 = vector.extract_strided_slice %167 {offsets = [0, 96], sizes = [1, 32], strides = [1, 1]} : vector<1x128xf32> to vector<1x32xf32>
    %172 = arith.mulf %169, %129 : vector<1x32xf32>
    %173 = arith.mulf %168, %170 : vector<1x32xf32>
    %174 = arith.addf %172, %173 : vector<1x32xf32>
    %175 = math.tanh %174 : vector<1x32xf32>
    %176 = arith.mulf %171, %175 : vector<1x32xf32>
    %177 = tpu.concatenate %176, %152 in 1 : vector<1x32xf32>, vector<1x32xf32> -> vector<1x64xf32>
    %cst_54 = arith.constant dense<0.000000e+00> : vector<1x128xf32>
    %178 = tpu.matmul %177, %8, %cst_54 {dimension_numbers = #tpu.dot_dimension_numbers<[1], [0], [0], [1], [0, 0, 1, 1], [], []>} : vector<1x64xf32>, vector<64x128xf32>, vector<1x128xf32> -> vector<1x128xf32>
    %179 = arith.addf %178, %9 : vector<1x128xf32>
    %cst_55 = arith.constant 5.000000e-01 : f32
    %180 = vector.broadcast %cst_55 : f32 to vector<1x128xf32>
    %181 = arith.mulf %180, %179 : vector<1x128xf32>
    %182 = arith.select %15, %179, %181 : vector<1x128xi1>, vector<1x128xf32>
    %183 = math.tanh %182 : vector<1x128xf32>
    %cst_56 = arith.constant 5.000000e-01 : f32
    %184 = vector.broadcast %cst_56 : f32 to vector<1x128xf32>
    %185 = arith.mulf %184, %183 : vector<1x128xf32>
    %cst_57 = arith.constant 5.000000e-01 : f32
    %186 = vector.broadcast %cst_57 : f32 to vector<1x128xf32>
    %187 = arith.addf %185, %186 : vector<1x128xf32>
    %188 = arith.select %15, %183, %187 : vector<1x128xi1>, vector<1x128xf32>
    %189 = vector.extract_strided_slice %188 {offsets = [0, 0], sizes = [1, 32], strides = [1, 1]} : vector<1x128xf32> to vector<1x32xf32>
    %190 = vector.extract_strided_slice %188 {offsets = [0, 32], sizes = [1, 32], strides = [1, 1]} : vector<1x128xf32> to vector<1x32xf32>
    %191 = vector.extract_strided_slice %188 {offsets = [0, 64], sizes = [1, 32], strides = [1, 1]} : vector<1x128xf32> to vector<1x32xf32>
    %192 = vector.extract_strided_slice %188 {offsets = [0, 96], sizes = [1, 32], strides = [1, 1]} : vector<1x128xf32> to vector<1x32xf32>
    %193 = arith.mulf %190, %150 : vector<1x32xf32>
    %194 = arith.mulf %189, %191 : vector<1x32xf32>
    %195 = arith.addf %193, %194 : vector<1x32xf32>
    %196 = math.tanh %195 : vector<1x32xf32>
    %197 = arith.mulf %192, %196 : vector<1x32xf32>
    %198 = arith.index_cast %c3_i32 : i32 to index
    %c0_58 = arith.constant 0 : index
    %199 = vector.load %arg12[%198, %c0_58] : memref<8x32xf32, #tpu.memory_space<vmem>>, vector<1x32xf32>
    tpu.vector_store %arg12[%198, %c0_58], %197 {strides = array<i32>} : memref<8x32xf32, #tpu.memory_space<vmem>>, vector<1x32xf32>,
    %c4_i32 = arith.constant 4 : i32
    %200 = arith.index_cast %c4_i32 : i32 to index
    %c0_59 = arith.constant 0 : index
    %201 = vector.load %arg11[%200, %c0_59] : memref<8x128xf32, #tpu.memory_space<vmem>>, vector<1x128xf32>
    %cst_60 = arith.constant dense<0.000000e+00> : vector<1x128xf32>
    %202 = tpu.matmul %176, %7, %cst_60 {dimension_numbers = #tpu.dot_dimension_numbers<[1], [0], [0], [1], [0, 0, 1, 1], [], []>} : vector<1x32xf32>, vector<32x128xf32>, vector<1x128xf32> -> vector<1x128xf32>
    %203 = arith.addf %201, %202 : vector<1x128xf32>
    %cst_61 = arith.constant 5.000000e-01 : f32
    %204 = vector.broadcast %cst_61 : f32 to vector<1x128xf32>
    %205 = arith.mulf %204, %203 : vector<1x128xf32>
    %206 = arith.select %15, %203, %205 : vector<1x128xi1>, vector<1x128xf32>
    %207 = math.tanh %206 : vector<1x128xf32>
    %cst_62 = arith.constant 5.000000e-01 : f32
    %208 = vector.broadcast %cst_62 : f32 to vector<1x128xf32>
    %209 = arith.mulf %208, %207 : vector<1x128xf32>
    %cst_63 = arith.constant 5.000000e-01 : f32
    %210 = vector.broadcast %cst_63 : f32 to vector<1x128xf32>
    %211 = arith.addf %209, %210 : vector<1x128xf32>
    %212 = arith.select %15, %207, %211 : vector<1x128xi1>, vector<1x128xf32>
    %213 = vector.extract_strided_slice %212 {offsets = [0, 0], sizes = [1, 32], strides = [1, 1]} : vector<1x128xf32> to vector<1x32xf32>
    %214 = vector.extract_strided_slice %212 {offsets = [0, 32], sizes = [1, 32], strides = [1, 1]} : vector<1x128xf32> to vector<1x32xf32>
    %215 = vector.extract_strided_slice %212 {offsets = [0, 64], sizes = [1, 32], strides = [1, 1]} : vector<1x128xf32> to vector<1x32xf32>
    %216 = vector.extract_strided_slice %212 {offsets = [0, 96], sizes = [1, 32], strides = [1, 1]} : vector<1x128xf32> to vector<1x32xf32>
    %217 = arith.mulf %214, %174 : vector<1x32xf32>
    %218 = arith.mulf %213, %215 : vector<1x32xf32>
    %219 = arith.addf %217, %218 : vector<1x32xf32>
    %220 = math.tanh %219 : vector<1x32xf32>
    %221 = arith.mulf %216, %220 : vector<1x32xf32>
    %222 = tpu.concatenate %221, %197 in 1 : vector<1x32xf32>, vector<1x32xf32> -> vector<1x64xf32>
    %cst_64 = arith.constant dense<0.000000e+00> : vector<1x128xf32>
    %223 = tpu.matmul %222, %8, %cst_64 {dimension_numbers = #tpu.dot_dimension_numbers<[1], [0], [0], [1], [0, 0, 1, 1], [], []>} : vector<1x64xf32>, vector<64x128xf32>, vector<1x128xf32> -> vector<1x128xf32>
    %224 = arith.addf %223, %9 : vector<1x128xf32>
    %cst_65 = arith.constant 5.000000e-01 : f32
    %225 = vector.broadcast %cst_65 : f32 to vector<1x128xf32>
    %226 = arith.mulf %225, %224 : vector<1x128xf32>
    %227 = arith.select %15, %224, %226 : vector<1x128xi1>, vector<1x128xf32>
    %228 = math.tanh %227 : vector<1x128xf32>
    %cst_66 = arith.constant 5.000000e-01 : f32
    %229 = vector.broadcast %cst_66 : f32 to vector<1x128xf32>
    %230 = arith.mulf %229, %228 : vector<1x128xf32>
    %cst_67 = arith.constant 5.000000e-01 : f32
    %231 = vector.broadcast %cst_67 : f32 to vector<1x128xf32>
    %232 = arith.addf %230, %231 : vector<1x128xf32>
    %233 = arith.select %15, %228, %232 : vector<1x128xi1>, vector<1x128xf32>
    %234 = vector.extract_strided_slice %233 {offsets = [0, 0], sizes = [1, 32], strides = [1, 1]} : vector<1x128xf32> to vector<1x32xf32>
    %235 = vector.extract_strided_slice %233 {offsets = [0, 32], sizes = [1, 32], strides = [1, 1]} : vector<1x128xf32> to vector<1x32xf32>
    %236 = vector.extract_strided_slice %233 {offsets = [0, 64], sizes = [1, 32], strides = [1, 1]} : vector<1x128xf32> to vector<1x32xf32>
    %237 = vector.extract_strided_slice %233 {offsets = [0, 96], sizes = [1, 32], strides = [1, 1]} : vector<1x128xf32> to vector<1x32xf32>
    %238 = arith.mulf %235, %195 : vector<1x32xf32>
    %239 = arith.mulf %234, %236 : vector<1x32xf32>
    %240 = arith.addf %238, %239 : vector<1x32xf32>
    %241 = math.tanh %240 : vector<1x32xf32>
    %242 = arith.mulf %237, %241 : vector<1x32xf32>
    %243 = arith.index_cast %c4_i32 : i32 to index
    %c0_68 = arith.constant 0 : index
    %244 = vector.load %arg12[%243, %c0_68] : memref<8x32xf32, #tpu.memory_space<vmem>>, vector<1x32xf32>
    tpu.vector_store %arg12[%243, %c0_68], %242 {strides = array<i32>} : memref<8x32xf32, #tpu.memory_space<vmem>>, vector<1x32xf32>,
    %c5_i32 = arith.constant 5 : i32
    %245 = arith.index_cast %c5_i32 : i32 to index
    %c0_69 = arith.constant 0 : index
    %246 = vector.load %arg11[%245, %c0_69] : memref<8x128xf32, #tpu.memory_space<vmem>>, vector<1x128xf32>
    %cst_70 = arith.constant dense<0.000000e+00> : vector<1x128xf32>
    %247 = tpu.matmul %221, %7, %cst_70 {dimension_numbers = #tpu.dot_dimension_numbers<[1], [0], [0], [1], [0, 0, 1, 1], [], []>} : vector<1x32xf32>, vector<32x128xf32>, vector<1x128xf32> -> vector<1x128xf32>
    %248 = arith.addf %246, %247 : vector<1x128xf32>
    %cst_71 = arith.constant 5.000000e-01 : f32
    %249 = vector.broadcast %cst_71 : f32 to vector<1x128xf32>
    %250 = arith.mulf %249, %248 : vector<1x128xf32>
    %251 = arith.select %15, %248, %250 : vector<1x128xi1>, vector<1x128xf32>
    %252 = math.tanh %251 : vector<1x128xf32>
    %cst_72 = arith.constant 5.000000e-01 : f32
    %253 = vector.broadcast %cst_72 : f32 to vector<1x128xf32>
    %254 = arith.mulf %253, %252 : vector<1x128xf32>
    %cst_73 = arith.constant 5.000000e-01 : f32
    %255 = vector.broadcast %cst_73 : f32 to vector<1x128xf32>
    %256 = arith.addf %254, %255 : vector<1x128xf32>
    %257 = arith.select %15, %252, %256 : vector<1x128xi1>, vector<1x128xf32>
    %258 = vector.extract_strided_slice %257 {offsets = [0, 0], sizes = [1, 32], strides = [1, 1]} : vector<1x128xf32> to vector<1x32xf32>
    %259 = vector.extract_strided_slice %257 {offsets = [0, 32], sizes = [1, 32], strides = [1, 1]} : vector<1x128xf32> to vector<1x32xf32>
    %260 = vector.extract_strided_slice %257 {offsets = [0, 64], sizes = [1, 32], strides = [1, 1]} : vector<1x128xf32> to vector<1x32xf32>
    %261 = vector.extract_strided_slice %257 {offsets = [0, 96], sizes = [1, 32], strides = [1, 1]} : vector<1x128xf32> to vector<1x32xf32>
    %262 = arith.mulf %259, %219 : vector<1x32xf32>
    %263 = arith.mulf %258, %260 : vector<1x32xf32>
    %264 = arith.addf %262, %263 : vector<1x32xf32>
    %265 = math.tanh %264 : vector<1x32xf32>
    %266 = arith.mulf %261, %265 : vector<1x32xf32>
    %267 = tpu.concatenate %266, %242 in 1 : vector<1x32xf32>, vector<1x32xf32> -> vector<1x64xf32>
    %cst_74 = arith.constant dense<0.000000e+00> : vector<1x128xf32>
    %268 = tpu.matmul %267, %8, %cst_74 {dimension_numbers = #tpu.dot_dimension_numbers<[1], [0], [0], [1], [0, 0, 1, 1], [], []>} : vector<1x64xf32>, vector<64x128xf32>, vector<1x128xf32> -> vector<1x128xf32>
    %269 = arith.addf %268, %9 : vector<1x128xf32>
    %cst_75 = arith.constant 5.000000e-01 : f32
    %270 = vector.broadcast %cst_75 : f32 to vector<1x128xf32>
    %271 = arith.mulf %270, %269 : vector<1x128xf32>
    %272 = arith.select %15, %269, %271 : vector<1x128xi1>, vector<1x128xf32>
    %273 = math.tanh %272 : vector<1x128xf32>
    %cst_76 = arith.constant 5.000000e-01 : f32
    %274 = vector.broadcast %cst_76 : f32 to vector<1x128xf32>
    %275 = arith.mulf %274, %273 : vector<1x128xf32>
    %cst_77 = arith.constant 5.000000e-01 : f32
    %276 = vector.broadcast %cst_77 : f32 to vector<1x128xf32>
    %277 = arith.addf %275, %276 : vector<1x128xf32>
    %278 = arith.select %15, %273, %277 : vector<1x128xi1>, vector<1x128xf32>
    %279 = vector.extract_strided_slice %278 {offsets = [0, 0], sizes = [1, 32], strides = [1, 1]} : vector<1x128xf32> to vector<1x32xf32>
    %280 = vector.extract_strided_slice %278 {offsets = [0, 32], sizes = [1, 32], strides = [1, 1]} : vector<1x128xf32> to vector<1x32xf32>
    %281 = vector.extract_strided_slice %278 {offsets = [0, 64], sizes = [1, 32], strides = [1, 1]} : vector<1x128xf32> to vector<1x32xf32>
    %282 = vector.extract_strided_slice %278 {offsets = [0, 96], sizes = [1, 32], strides = [1, 1]} : vector<1x128xf32> to vector<1x32xf32>
    %283 = arith.mulf %280, %240 : vector<1x32xf32>
    %284 = arith.mulf %279, %281 : vector<1x32xf32>
    %285 = arith.addf %283, %284 : vector<1x32xf32>
    %286 = math.tanh %285 : vector<1x32xf32>
    %287 = arith.mulf %282, %286 : vector<1x32xf32>
    %288 = arith.index_cast %c5_i32 : i32 to index
    %c0_78 = arith.constant 0 : index
    %289 = vector.load %arg12[%288, %c0_78] : memref<8x32xf32, #tpu.memory_space<vmem>>, vector<1x32xf32>
    tpu.vector_store %arg12[%288, %c0_78], %287 {strides = array<i32>} : memref<8x32xf32, #tpu.memory_space<vmem>>, vector<1x32xf32>,
    %c6_i32 = arith.constant 6 : i32
    %290 = arith.index_cast %c6_i32 : i32 to index
    %c0_79 = arith.constant 0 : index
    %291 = vector.load %arg11[%290, %c0_79] : memref<8x128xf32, #tpu.memory_space<vmem>>, vector<1x128xf32>
    %cst_80 = arith.constant dense<0.000000e+00> : vector<1x128xf32>
    %292 = tpu.matmul %266, %7, %cst_80 {dimension_numbers = #tpu.dot_dimension_numbers<[1], [0], [0], [1], [0, 0, 1, 1], [], []>} : vector<1x32xf32>, vector<32x128xf32>, vector<1x128xf32> -> vector<1x128xf32>
    %293 = arith.addf %291, %292 : vector<1x128xf32>
    %cst_81 = arith.constant 5.000000e-01 : f32
    %294 = vector.broadcast %cst_81 : f32 to vector<1x128xf32>
    %295 = arith.mulf %294, %293 : vector<1x128xf32>
    %296 = arith.select %15, %293, %295 : vector<1x128xi1>, vector<1x128xf32>
    %297 = math.tanh %296 : vector<1x128xf32>
    %cst_82 = arith.constant 5.000000e-01 : f32
    %298 = vector.broadcast %cst_82 : f32 to vector<1x128xf32>
    %299 = arith.mulf %298, %297 : vector<1x128xf32>
    %cst_83 = arith.constant 5.000000e-01 : f32
    %300 = vector.broadcast %cst_83 : f32 to vector<1x128xf32>
    %301 = arith.addf %299, %300 : vector<1x128xf32>
    %302 = arith.select %15, %297, %301 : vector<1x128xi1>, vector<1x128xf32>
    %303 = vector.extract_strided_slice %302 {offsets = [0, 0], sizes = [1, 32], strides = [1, 1]} : vector<1x128xf32> to vector<1x32xf32>
    %304 = vector.extract_strided_slice %302 {offsets = [0, 32], sizes = [1, 32], strides = [1, 1]} : vector<1x128xf32> to vector<1x32xf32>
    %305 = vector.extract_strided_slice %302 {offsets = [0, 64], sizes = [1, 32], strides = [1, 1]} : vector<1x128xf32> to vector<1x32xf32>
    %306 = vector.extract_strided_slice %302 {offsets = [0, 96], sizes = [1, 32], strides = [1, 1]} : vector<1x128xf32> to vector<1x32xf32>
    %307 = arith.mulf %304, %264 : vector<1x32xf32>
    %308 = arith.mulf %303, %305 : vector<1x32xf32>
    %309 = arith.addf %307, %308 : vector<1x32xf32>
    %310 = math.tanh %309 : vector<1x32xf32>
    %311 = arith.mulf %306, %310 : vector<1x32xf32>
    %312 = tpu.concatenate %311, %287 in 1 : vector<1x32xf32>, vector<1x32xf32> -> vector<1x64xf32>
    %cst_84 = arith.constant dense<0.000000e+00> : vector<1x128xf32>
    %313 = tpu.matmul %312, %8, %cst_84 {dimension_numbers = #tpu.dot_dimension_numbers<[1], [0], [0], [1], [0, 0, 1, 1], [], []>} : vector<1x64xf32>, vector<64x128xf32>, vector<1x128xf32> -> vector<1x128xf32>
    %314 = arith.addf %313, %9 : vector<1x128xf32>
    %cst_85 = arith.constant 5.000000e-01 : f32
    %315 = vector.broadcast %cst_85 : f32 to vector<1x128xf32>
    %316 = arith.mulf %315, %314 : vector<1x128xf32>
    %317 = arith.select %15, %314, %316 : vector<1x128xi1>, vector<1x128xf32>
    %318 = math.tanh %317 : vector<1x128xf32>
    %cst_86 = arith.constant 5.000000e-01 : f32
    %319 = vector.broadcast %cst_86 : f32 to vector<1x128xf32>
    %320 = arith.mulf %319, %318 : vector<1x128xf32>
    %cst_87 = arith.constant 5.000000e-01 : f32
    %321 = vector.broadcast %cst_87 : f32 to vector<1x128xf32>
    %322 = arith.addf %320, %321 : vector<1x128xf32>
    %323 = arith.select %15, %318, %322 : vector<1x128xi1>, vector<1x128xf32>
    %324 = vector.extract_strided_slice %323 {offsets = [0, 0], sizes = [1, 32], strides = [1, 1]} : vector<1x128xf32> to vector<1x32xf32>
    %325 = vector.extract_strided_slice %323 {offsets = [0, 32], sizes = [1, 32], strides = [1, 1]} : vector<1x128xf32> to vector<1x32xf32>
    %326 = vector.extract_strided_slice %323 {offsets = [0, 64], sizes = [1, 32], strides = [1, 1]} : vector<1x128xf32> to vector<1x32xf32>
    %327 = vector.extract_strided_slice %323 {offsets = [0, 96], sizes = [1, 32], strides = [1, 1]} : vector<1x128xf32> to vector<1x32xf32>
    %328 = arith.mulf %325, %285 : vector<1x32xf32>
    %329 = arith.mulf %324, %326 : vector<1x32xf32>
    %330 = arith.addf %328, %329 : vector<1x32xf32>
    %331 = math.tanh %330 : vector<1x32xf32>
    %332 = arith.mulf %327, %331 : vector<1x32xf32>
    %333 = arith.index_cast %c6_i32 : i32 to index
    %c0_88 = arith.constant 0 : index
    %334 = vector.load %arg12[%333, %c0_88] : memref<8x32xf32, #tpu.memory_space<vmem>>, vector<1x32xf32>
    tpu.vector_store %arg12[%333, %c0_88], %332 {strides = array<i32>} : memref<8x32xf32, #tpu.memory_space<vmem>>, vector<1x32xf32>,
    %c7_i32 = arith.constant 7 : i32
    %335 = arith.index_cast %c7_i32 : i32 to index
    %c0_89 = arith.constant 0 : index
    %336 = vector.load %arg11[%335, %c0_89] : memref<8x128xf32, #tpu.memory_space<vmem>>, vector<1x128xf32>
    %cst_90 = arith.constant dense<0.000000e+00> : vector<1x128xf32>
    %337 = tpu.matmul %311, %7, %cst_90 {dimension_numbers = #tpu.dot_dimension_numbers<[1], [0], [0], [1], [0, 0, 1, 1], [], []>} : vector<1x32xf32>, vector<32x128xf32>, vector<1x128xf32> -> vector<1x128xf32>
    %338 = arith.addf %336, %337 : vector<1x128xf32>
    %cst_91 = arith.constant 5.000000e-01 : f32
    %339 = vector.broadcast %cst_91 : f32 to vector<1x128xf32>
    %340 = arith.mulf %339, %338 : vector<1x128xf32>
    %341 = arith.select %15, %338, %340 : vector<1x128xi1>, vector<1x128xf32>
    %342 = math.tanh %341 : vector<1x128xf32>
    %cst_92 = arith.constant 5.000000e-01 : f32
    %343 = vector.broadcast %cst_92 : f32 to vector<1x128xf32>
    %344 = arith.mulf %343, %342 : vector<1x128xf32>
    %cst_93 = arith.constant 5.000000e-01 : f32
    %345 = vector.broadcast %cst_93 : f32 to vector<1x128xf32>
    %346 = arith.addf %344, %345 : vector<1x128xf32>
    %347 = arith.select %15, %342, %346 : vector<1x128xi1>, vector<1x128xf32>
    %348 = vector.extract_strided_slice %347 {offsets = [0, 0], sizes = [1, 32], strides = [1, 1]} : vector<1x128xf32> to vector<1x32xf32>
    %349 = vector.extract_strided_slice %347 {offsets = [0, 32], sizes = [1, 32], strides = [1, 1]} : vector<1x128xf32> to vector<1x32xf32>
    %350 = vector.extract_strided_slice %347 {offsets = [0, 64], sizes = [1, 32], strides = [1, 1]} : vector<1x128xf32> to vector<1x32xf32>
    %351 = vector.extract_strided_slice %347 {offsets = [0, 96], sizes = [1, 32], strides = [1, 1]} : vector<1x128xf32> to vector<1x32xf32>
    %352 = arith.mulf %349, %309 : vector<1x32xf32>
    %353 = arith.mulf %348, %350 : vector<1x32xf32>
    %354 = arith.addf %352, %353 : vector<1x32xf32>
    %355 = math.tanh %354 : vector<1x32xf32>
    %356 = arith.mulf %351, %355 : vector<1x32xf32>
    %357 = tpu.concatenate %356, %332 in 1 : vector<1x32xf32>, vector<1x32xf32> -> vector<1x64xf32>
    %cst_94 = arith.constant dense<0.000000e+00> : vector<1x128xf32>
    %358 = tpu.matmul %357, %8, %cst_94 {dimension_numbers = #tpu.dot_dimension_numbers<[1], [0], [0], [1], [0, 0, 1, 1], [], []>} : vector<1x64xf32>, vector<64x128xf32>, vector<1x128xf32> -> vector<1x128xf32>
    %359 = arith.addf %358, %9 : vector<1x128xf32>
    %cst_95 = arith.constant 5.000000e-01 : f32
    %360 = vector.broadcast %cst_95 : f32 to vector<1x128xf32>
    %361 = arith.mulf %360, %359 : vector<1x128xf32>
    %362 = arith.select %15, %359, %361 : vector<1x128xi1>, vector<1x128xf32>
    %363 = math.tanh %362 : vector<1x128xf32>
    %cst_96 = arith.constant 5.000000e-01 : f32
    %364 = vector.broadcast %cst_96 : f32 to vector<1x128xf32>
    %365 = arith.mulf %364, %363 : vector<1x128xf32>
    %cst_97 = arith.constant 5.000000e-01 : f32
    %366 = vector.broadcast %cst_97 : f32 to vector<1x128xf32>
    %367 = arith.addf %365, %366 : vector<1x128xf32>
    %368 = arith.select %15, %363, %367 : vector<1x128xi1>, vector<1x128xf32>
    %369 = vector.extract_strided_slice %368 {offsets = [0, 0], sizes = [1, 32], strides = [1, 1]} : vector<1x128xf32> to vector<1x32xf32>
    %370 = vector.extract_strided_slice %368 {offsets = [0, 32], sizes = [1, 32], strides = [1, 1]} : vector<1x128xf32> to vector<1x32xf32>
    %371 = vector.extract_strided_slice %368 {offsets = [0, 64], sizes = [1, 32], strides = [1, 1]} : vector<1x128xf32> to vector<1x32xf32>
    %372 = vector.extract_strided_slice %368 {offsets = [0, 96], sizes = [1, 32], strides = [1, 1]} : vector<1x128xf32> to vector<1x32xf32>
    %373 = arith.mulf %370, %330 : vector<1x32xf32>
    %374 = arith.mulf %369, %371 : vector<1x32xf32>
    %375 = arith.addf %373, %374 : vector<1x32xf32>
    %376 = math.tanh %375 : vector<1x32xf32>
    %377 = arith.mulf %372, %376 : vector<1x32xf32>
    %378 = arith.index_cast %c7_i32 : i32 to index
    %c0_98 = arith.constant 0 : index
    %379 = vector.load %arg12[%378, %c0_98] : memref<8x32xf32, #tpu.memory_space<vmem>>, vector<1x32xf32>
    tpu.vector_store %arg12[%378, %c0_98], %377 {strides = array<i32>} : memref<8x32xf32, #tpu.memory_space<vmem>>, vector<1x32xf32>,
    %c8_i32 = arith.constant 8 : i32
    %c0_99 = arith.constant 0 : index
    %c0_100 = arith.constant 0 : index
    %380 = vector.load %arg9[%c0_99, %c0_100] : memref<2x32xf32, #tpu.memory_space<vmem>>, vector<1x32xf32>
    tpu.vector_store %arg9[%c0_99, %c0_100], %356 {strides = array<i32>} : memref<2x32xf32, #tpu.memory_space<vmem>>, vector<1x32xf32>,
    %c1_101 = arith.constant 1 : index
    %c0_102 = arith.constant 0 : index
    %381 = vector.load %arg9[%c1_101, %c0_102] : memref<2x32xf32, #tpu.memory_space<vmem>>, vector<1x32xf32>
    tpu.vector_store %arg9[%c1_101, %c0_102], %377 {strides = array<i32>} : memref<2x32xf32, #tpu.memory_space<vmem>>, vector<1x32xf32>,
    %c0_103 = arith.constant 0 : index
    %c0_104 = arith.constant 0 : index
    %382 = vector.load %arg10[%c0_103, %c0_104] : memref<2x32xf32, #tpu.memory_space<vmem>>, vector<1x32xf32>
    tpu.vector_store %arg10[%c0_103, %c0_104], %354 {strides = array<i32>} : memref<2x32xf32, #tpu.memory_space<vmem>>, vector<1x32xf32>,
    %c1_105 = arith.constant 1 : index
    %c0_106 = arith.constant 0 : index
    %383 = vector.load %arg10[%c1_105, %c0_106] : memref<2x32xf32, #tpu.memory_space<vmem>>, vector<1x32xf32>
    tpu.vector_store %arg10[%c1_105, %c0_106], %375 {strides = array<i32>} : memref<2x32xf32, #tpu.memory_space<vmem>>, vector<1x32xf32>,
    %c0_107 = arith.constant 0 : index
    %c0_108 = arith.constant 0 : index
    %384 = vector.load %arg12[%c0_107, %c0_108] : memref<8x32xf32, #tpu.memory_space<vmem>>, vector<8x32xf32>
    %c0_109 = arith.constant 0 : index
    %c0_110 = arith.constant 0 : index
    %385 = vector.load %arg6[%c0_109, %c0_110] : memref<32x10xf32, #tpu.memory_space<vmem>>, vector<32x10xf32>
    %cst_111 = arith.constant dense<0.000000e+00> : vector<8x10xf32>
    %386 = tpu.matmul %384, %385, %cst_111 {dimension_numbers = #tpu.dot_dimension_numbers<[1], [0], [0], [1], [0, 0, 1, 1], [], []>} : vector<8x32xf32>, vector<32x10xf32>, vector<8x10xf32> -> vector<8x10xf32>
    %c0_112 = arith.constant 0 : index
    %c0_113 = arith.constant 0 : index
    %387 = vector.load %arg7[%c0_112, %c0_113] : memref<1x10xf32, #tpu.memory_space<vmem>>, vector<1x10xf32>
    %388 = vector.broadcast %387 : vector<1x10xf32> to vector<8x10xf32>
    %389 = arith.addf %386, %388 : vector<8x10xf32>
    %cst_114 = arith.constant dense<0xFF800000> : vector<8xf32>
    %390 = vector.multi_reduction <maximumf>, %389, %cst_114 [1] : vector<8x10xf32> to vector<8xf32>
    %391 = vector.shape_cast %390 : vector<8xf32> to vector<8x1xf32>
    %392 = vector.broadcast %391 : vector<8x1xf32> to vector<8x10xf32>
    %393 = arith.subf %389, %392 : vector<8x10xf32>
    %394 = math.exp %393 : vector<8x10xf32>
    %cst_115 = arith.constant dense<0.000000e+00> : vector<8xf32>
    %395 = vector.multi_reduction <add>, %394, %cst_115 [1] : vector<8x10xf32> to vector<8xf32>
    %396 = vector.shape_cast %395 : vector<8xf32> to vector<8x1xf32>
    %397 = math.log %396 : vector<8x1xf32>
    %398 = vector.broadcast %397 : vector<8x1xf32> to vector<8x10xf32>
    %399 = arith.subf %393, %398 : vector<8x10xf32>
    %c0_116 = arith.constant 0 : index
    %c0_117 = arith.constant 0 : index
    %400 = vector.load %arg8[%c0_116, %c0_117] : memref<8x10xf32, #tpu.memory_space<vmem>>, vector<8x10xf32>
    tpu.vector_store %arg8[%c0_116, %c0_117], %399 {strides = array<i32>} : memref<8x10xf32, #tpu.memory_space<vmem>>, vector<8x10xf32>,
    return
  }
}

</mosaic_0001>

<llo_original>
// kernel: tpu_custom_call.1
$region0: #{tpu_custom_call.1}
  #allocation0 [shape = 'u32[]', space=smem, size = 0x4, offset = 0x4, fixed_abs, tag = 'smem constant byte address 0x4 - core index']
  #allocation1 [shape = 'u32[144,128]{1,0:T(1,128)}', space=vmem, size = 0x12000, scoped, tag = 'internal scratch']
  #allocation2 [shape = 'f32[8,128]{1,0:T(8,128)}', space=vmem, size = 0x1000, scoped, tag = 'scratch operand']
  #allocation3 [shape = 'f32[8,32]{1,0:T(8,128)}', space=vmem, size = 0x1000, scoped, tag = 'scratch operand']
  %s0 = inlined_call_operand.vmem [shape: f32[8,57], index: 0, kind: input, shape index: {}]
  %s1 = inlined_call_operand.vmem [shape: f32[2,32], index: 1, kind: input, shape index: {}]
  %s2 = inlined_call_operand.vmem [shape: f32[2,32], index: 2, kind: input, shape index: {}]
  %s3 = inlined_call_operand.hbm [shape: f32[57,128], index: 3, kind: input, shape index: {}]
  %s4 = inlined_call_operand.hbm [shape: f32[96,128], index: 4, kind: input, shape index: {}]
  %s5 = inlined_call_operand.vmem [shape: f32[2,128], index: 5, kind: input, shape index: {}]
  %s6 = inlined_call_operand.vmem [shape: f32[32,10], index: 6, kind: input, shape index: {}]
  %s7 = inlined_call_operand.vmem [shape: f32[1,10], index: 7, kind: input, shape index: {}]
  %s8 = inlined_call_operand.hbm [shape: f32[8,10], index: 8, kind: output, shape index: {0}]
  %s9 = inlined_call_operand.hbm [shape: f32[2,32], index: 9, kind: output, shape index: {1}]
  %s10 = inlined_call_operand.hbm [shape: f32[2,32], index: 10, kind: output, shape index: {2}]
  %11 = xla_tuple %s8, %s9, %s10
  %s12 = sld [smem:[#allocation0]]
  $region66: #{tpu_custom_call.1} parent=0
    _
  %s14 = ssub.s32 1, %s12
  %s15 = scalar_select 0, %s14, %s12
  $region1: #{tpu_custom_call.1} parent=0
    #allocation4 [shape = 'u8[32768]{0}', space=vmem, size = 0x8000, scoped, tag = 'input window, operand 3, single buffered']
    #allocation5 [shape = 's32[1]{0}', space=sflag, size = 0x4, scoped, tag = 'scoped memory for tpu_custom_call.1']
    #allocation6 [shape = 's32[1]{0}', space=sflag, size = 0x4, scoped, tag = 'scoped memory for tpu_custom_call.1']
    #allocation7 [shape = 'u8[49152]{0}', space=vmem, size = 0xc000, scoped, tag = 'input window, operand 4, single buffered']
    #allocation8 [shape = 's32[1]{0}', space=sflag, size = 0x4, scoped, tag = 'scoped memory for tpu_custom_call.1']
    #allocation9 [shape = 'u8[4096]{0}', space=vmem, size = 0x1000, scoped, tag = 'output window, operand 0, single buffered']
    #allocation10 [shape = 'u8[1024]{0}', space=vmem, size = 0x400, scoped, tag = 'output window, operand 1, single buffered']
    #allocation11 [shape = 's32[1]{0}', space=sflag, size = 0x4, scoped, tag = 'scoped memory for tpu_custom_call.1']
    #allocation12 [shape = 'u8[1024]{0}', space=vmem, size = 0x400, scoped, tag = 'output window, operand 2, single buffered']
    %16 = vsyncpa [#allocation5], 0
    %17 = vsyncpa [#allocation8], 0
    %18 = vsyncpa [#allocation6], 0
    %19 = vsyncpa [#allocation11], 0
    // Predicated region
    $region2: #{tpu_custom_call.1} parent=1 // pred_check
      _
    $region3: #{tpu_custom_call.1} parent=1 // pred_check_branch
      %21 = sbr.rel (0) target = $region5
    $region4: #{tpu_custom_call.1} parent=1 // pred_region
      _
    $region5: #{tpu_custom_call.1} parent=1 // pred_fallthru
      _
    // Predicated region
    $region6: #{tpu_custom_call.1} parent=1 // pred_check
      _
    $region7: #{tpu_custom_call.1} parent=1 // pred_check_branch
      %23 = sbr.rel (0) target = $region9
    $region8: #{tpu_custom_call.1} parent=1 // pred_region
      _
    $region9: #{tpu_custom_call.1} parent=1 // pred_fallthru
      _
    // Predicated region
    $region10: #{tpu_custom_call.1} parent=1 // pred_check
      _
    $region11: #{tpu_custom_call.1} parent=1 // pred_check_branch
      %25 = sbr.rel (0) target = $region13
    $region12: #{tpu_custom_call.1} parent=1 // pred_region
      _
    $region13: #{tpu_custom_call.1} parent=1 // pred_fallthru
      _
    // Predicated region
    $region14: #{tpu_custom_call.1} parent=1 // pred_check
      _
    $region15: #{tpu_custom_call.1} parent=1 // pred_check_branch
      %27 = sbr.rel (0) target = $region17
    $region16: #{tpu_custom_call.1} parent=1 // pred_region
      %s29 = ssub.s32 1024, 1024
      %30 = vsyncadd [#allocation5], %s29
      %s31 = sshll.u32 [#allocation4], 4
      %s32 = int_to_ptr.vmem [resolvable:$true] %s31
      %37 = dma.hbm_to_vmem [thread:$0]  %s3, 1024, %s32, [#allocation5], 128, 128, 8
    $region17: #{tpu_custom_call.1} parent=1 // pred_fallthru
      _
    // Predicated region
    $region18: #{tpu_custom_call.1} parent=1 // pred_check
      _
    $region19: #{tpu_custom_call.1} parent=1 // pred_check_branch
      %39 = sbr.rel (0) target = $region21
    $region20: #{tpu_custom_call.1} parent=1 // pred_region
      %s41 = ssub.s32 1536, 1536
      %42 = vsyncadd [#allocation8], %s41
      %s43 = sshll.u32 [#allocation7], 4
      %s44 = int_to_ptr.vmem [resolvable:$true] %s43
      %49 = dma.hbm_to_vmem [thread:$0]  %s4, 1536, %s44, [#allocation8], 128, 128, 8
    $region21: #{tpu_custom_call.1} parent=1 // pred_fallthru
      _
    // Predicated region
    $region22: #{tpu_custom_call.1} parent=1 // pred_check
      _
    $region23: #{tpu_custom_call.1} parent=1 // pred_check_branch
      %51 = sbr.rel (0) target = $region25
    $region24: #{tpu_custom_call.1} parent=1 // pred_region
      _
    $region25: #{tpu_custom_call.1} parent=1 // pred_fallthru
      _
    // Predicated region
    $region26: #{tpu_custom_call.1} parent=1 // pred_check
      _
    $region27: #{tpu_custom_call.1} parent=1 // pred_check_branch
      %53 = sbr.rel (0) target = $region29
    $region28: #{tpu_custom_call.1} parent=1 // pred_region
      _
    $region29: #{tpu_custom_call.1} parent=1 // pred_fallthru
      _
    // Predicated region
    $region30: #{tpu_custom_call.1} parent=1 // pred_check
      _
    $region31: #{tpu_custom_call.1} parent=1 // pred_check_branch
      %55 = sbr.rel (0) target = $region33
    $region32: #{tpu_custom_call.1} parent=1 // pred_region
      _
    $region33: #{tpu_custom_call.1} parent=1 // pred_fallthru
      _
    // Predicated region
    $region34: #{tpu_custom_call.1} parent=1 // pred_check
      _
    $region35: #{tpu_custom_call.1} parent=1 // pred_check_branch
      %57 = sbr.rel (0) target = $region37
    $region36: #{tpu_custom_call.1} parent=1 // pred_region
      %58 = dma.done [#allocation5], 1024
    $region37: #{tpu_custom_call.1} parent=1 // pred_fallthru
      _
    // Predicated region
    $region38: #{tpu_custom_call.1} parent=1 // pred_check
      _
    $region39: #{tpu_custom_call.1} parent=1 // pred_check_branch
      %60 = sbr.rel (0) target = $region41
    $region40: #{tpu_custom_call.1} parent=1 // pred_region
      %61 = dma.done [#allocation8], 1536
    $region41: #{tpu_custom_call.1} parent=1 // pred_fallthru
      _
    %v62 = vld [vmem:[%s0] sm:$0xff]
    %v63 = vld [vmem:[#allocation4] sm:$0xff]
    %v64 = vld [vmem:[#allocation4 + $0x8] sm:$0xff]
    %v65 = vld [vmem:[#allocation4 + $0x10] sm:$0xff]
    %v66 = vld [vmem:[#allocation4 + $0x18] sm:$0xff]
    %v67 = vld [vmem:[#allocation4 + $0x20] sm:$0xff]
    %v68 = vld [vmem:[#allocation4 + $0x28] sm:$0xff]
    %v69 = vld [vmem:[#allocation4 + $0x30] sm:$0xff]
    %v70 = vld [vmem:[#allocation4 + $0x38] sm:$0x1]
    %v71 = vld [vmem:[%s5] sm:$0x1]
    %v72 = vlaneseq
    %v73 = vshrl.u32 %v72, 7
    %v74 = vsub.s32 0, %v73
    %v75 = vrot.slane %v71, %v74
    %vm76 = vcmask 465920
    %v78 = vsel %vm76, %v62, 0
    %vm80 = vcmask 1040384
    %v82 = vsel %vm80, %v70, 0
    %84 = vmatprep.subr.mxu0 0.0
    %85 = vmatpush1.msra.mxu0 0.0
    %86 = vmatprep.subr.mxu0 0.0
    %87 = vmatpush1.msra.mxu0 0.0
    %88 = vmatprep.subr.mxu0 0.0
    %89 = vmatpush1.msra.mxu0 0.0
    %90 = vmatprep.subr.mxu0 0.0
    %91 = vmatpush1.msra.mxu0 0.0
    %92 = vmatprep.subr.mxu0 0.0
    %93 = vmatpush1.msra.mxu0 0.0
    %94 = vmatprep.subr.mxu0 0.0
    %95 = vmatpush1.msra.mxu0 0.0
    %96 = vmatprep.subr.mxu0 0.0
    %97 = vmatpush1.msra.mxu0 0.0
    %98 = vmatprep.subr.mxu0 0.0
    %99 = vmatpush1.msra.mxu0 0.0
    %100 = vmatprep.subr.mxu0 0.0
    %101 = vmatpush1.msra.mxu0 %v82
    %102 = vmatprep.subr.mxu0 0.0
    %103 = vmatpush1.msra.mxu0 %v69
    %104 = vmatprep.subr.mxu0 0.0
    %105 = vmatpush1.msra.mxu0 %v68
    %106 = vmatprep.subr.mxu0 0.0
    %107 = vmatpush1.msra.mxu0 %v67
    %108 = vmatprep.subr.mxu0 0.0
    %109 = vmatpush1.msra.mxu0 %v66
    %110 = vmatprep.subr.mxu0 0.0
    %111 = vmatpush1.msra.mxu0 %v65
    %112 = vmatprep.subr.mxu0 0.0
    %113 = vmatpush1.msra.mxu0 %v64
    %114 = vmatprep.subr.mxu0 0.0
    %115 = vmatpush1.msra.mxu0 %v63
    %116 = vmatprep.subr.mxu0 0.0
    %117 = vmatpush2.msra.mxu0 0.0
    %118 = vmatprep.subr.mxu0 0.0
    %119 = vmatpush2.msra.mxu0 0.0
    %120 = vmatprep.subr.mxu0 0.0
    %121 = vmatpush2.msra.mxu0 0.0
    %122 = vmatprep.subr.mxu0 0.0
    %123 = vmatpush2.msra.mxu0 0.0
    %124 = vmatprep.subr.mxu0 0.0
    %125 = vmatpush2.msra.mxu0 0.0
    %126 = vmatprep.subr.mxu0 0.0
    %127 = vmatpush2.msra.mxu0 0.0
    %128 = vmatprep.subr.mxu0 0.0
    %129 = vmatpush2.msra.mxu0 0.0
    %130 = vmatprep.subr.mxu0 0.0
    %131 = vmatpush2.msra.mxu0 0.0
    %132 = vmatprep.subr.mxu0 0.0
    %133 = vmatpush2.msra.mxu0 0.0
    %134 = vmatprep.subr.mxu0 0.0
    %135 = vmatpush2.msra.mxu0 0.0
    %136 = vmatprep.subr.mxu0 0.0
    %137 = vmatpush2.msra.mxu0 0.0
    %138 = vmatprep.subr.mxu0 0.0
    %139 = vmatpush2.msra.mxu0 0.0
    %140 = vmatprep.subr.mxu0 0.0
    %141 = vmatpush2.msra.mxu0 0.0
    %142 = vmatprep.subr.mxu0 0.0
    %143 = vmatpush2.msra.mxu0 0.0
    %144 = vmatprep.subr.mxu0 0.0
    %145 = vmatpush2.msra.mxu0 0.0
    %146 = vmatprep.subr.mxu0 0.0
    %147 = vmatpush2.msra.mxu0 0.0
    %148 = vmatprep.mubr.f32.mxu0 0.0
    %149 = vmatmul.mubr.f32.gmra.mxu0 %v78
    %v150 = vpop.f32.mrf.mxu0
    %v151 = vadd.f32 %v75, %v150
    %v152 = vpop.f32.mrf.mxu0
    %153 = vdwg.mxu0
    %154 = vst [vmem:[#allocation2] sm:$0xff] %v151
    %v155 = vld [vmem:[#allocation7] sm:$0xff]
    %v156 = vld [vmem:[#allocation7 + $0x8] sm:$0xff]
    %v157 = vld [vmem:[#allocation7 + $0x10] sm:$0xff]
    %v158 = vld [vmem:[#allocation7 + $0x18] sm:$0xff]
    %v159 = vld [vmem:[#allocation7 + $0x20] sm:$0xff]
    %v160 = vld [vmem:[#allocation7 + $0x28] sm:$0xff]
    %v161 = vld [vmem:[#allocation7 + $0x30] sm:$0xff]
    %v162 = vld [vmem:[#allocation7 + $0x38] sm:$0xff]
    %v163 = vld [vmem:[#allocation7 + $0x40] sm:$0xff]
    %v164 = vld [vmem:[#allocation7 + $0x48] sm:$0xff]
    %v165 = vld [vmem:[#allocation7 + $0x50] sm:$0xff]
    %v166 = vld [vmem:[#allocation7 + $0x58] sm:$0xff]
    %v167 = vld [vmem:[%s5 + $0x1] sm:$0x1]
    %v168 = vlaneseq
    %v169 = vand.u32 %v168, 127
    %vm170 = vcmp.ge.s32.totalorder %v169, 64
    %vm171 = vcmp.lt.s32.totalorder %v169, 96
    %vm172 = vmand %vm170, %vm171
    %v173 = vld [vmem:[%s1] sm:$0x1]
    %v174 = vld [vmem:[%s2] sm:$0x1]
    %v175 = vld [vmem:[%s1 + $0x1] sm:$0x1]
    %v176 = vld [vmem:[%s2 + $0x1] sm:$0x1]
    %v177 = vld [vmem:[#allocation2] sm:$0x1]
    %vm178 = vcmask 261120
    %v180 = vsel %vm178, %v173, 0
    %182 = vmatprep.subr.mxu0 0.0
    %183 = vmatpush1.msra.mxu0 0.0
    %184 = vmatprep.subr.mxu0 0.0
    %185 = vmatpush1.msra.mxu0 0.0
    %186 = vmatprep.subr.mxu0 0.0
    %187 = vmatpush1.msra.mxu0 0.0
    %188 = vmatprep.subr.mxu0 0.0
    %189 = vmatpush1.msra.mxu0 0.0
    %190 = vmatprep.subr.mxu0 0.0
    %191 = vmatpush1.msra.mxu0 0.0
    %192 = vmatprep.subr.mxu0 0.0
    %193 = vmatpush1.msra.mxu0 0.0
    %194 = vmatprep.subr.mxu0 0.0
    %195 = vmatpush1.msra.mxu0 0.0
    %196 = vmatprep.subr.mxu0 0.0
    %197 = vmatpush1.msra.mxu0 0.0
    %198 = vmatprep.subr.mxu0 0.0
    %199 = vmatpush1.msra.mxu0 0.0
    %200 = vmatprep.subr.mxu0 0.0
    %201 = vmatpush1.msra.mxu0 0.0
    %202 = vmatprep.subr.mxu0 0.0
    %203 = vmatpush1.msra.mxu0 0.0
    %204 = vmatprep.subr.mxu0 0.0
    %205 = vmatpush1.msra.mxu0 0.0
    %206 = vmatprep.subr.mxu0 0.0
    %207 = vmatpush1.msra.mxu0 %v158
    %208 = vmatprep.subr.mxu0 0.0
    %209 = vmatpush1.msra.mxu0 %v157
    %210 = vmatprep.subr.mxu0 0.0
    %211 = vmatpush1.msra.mxu0 %v156
    %212 = vmatprep.subr.mxu0 0.0
    %213 = vmatpush1.msra.mxu0 %v155
    %214 = vmatprep.subr.mxu0 0.0
    %215 = vmatpush2.msra.mxu0 0.0
    %216 = vmatprep.subr.mxu0 0.0
    %217 = vmatpush2.msra.mxu0 0.0
    %218 = vmatprep.subr.mxu0 0.0
    %219 = vmatpush2.msra.mxu0 0.0
    %220 = vmatprep.subr.mxu0 0.0
    %221 = vmatpush2.msra.mxu0 0.0
    %222 = vmatprep.subr.mxu0 0.0
    %223 = vmatpush2.msra.mxu0 0.0
    %224 = vmatprep.subr.mxu0 0.0
    %225 = vmatpush2.msra.mxu0 0.0
    %226 = vmatprep.subr.mxu0 0.0
    %227 = vmatpush2.msra.mxu0 0.0
    %228 = vmatprep.subr.mxu0 0.0
    %229 = vmatpush2.msra.mxu0 0.0
    %230 = vmatprep.subr.mxu0 0.0
    %231 = vmatpush2.msra.mxu0 0.0
    %232 = vmatprep.subr.mxu0 0.0
    %233 = vmatpush2.msra.mxu0 0.0
    %234 = vmatprep.subr.mxu0 0.0
    %235 = vmatpush2.msra.mxu0 0.0
    %236 = vmatprep.subr.mxu0 0.0
    %237 = vmatpush2.msra.mxu0 0.0
    %238 = vmatprep.subr.mxu0 0.0
    %239 = vmatpush2.msra.mxu0 0.0
    %240 = vmatprep.subr.mxu0 0.0
    %241 = vmatpush2.msra.mxu0 0.0
    %242 = vmatprep.subr.mxu0 0.0
    %243 = vmatpush2.msra.mxu0 0.0
    %244 = vmatprep.subr.mxu0 0.0
    %245 = vmatpush2.msra.mxu0 0.0
    %246 = vmatprep.mubr.f32.mxu0 0.0
    %247 = vmatmul.mubr.f32.gmra.mxu0 %v180
    %v248 = vpop.f32.mrf.mxu0
    %v249 = vadd.f32 0.0, %v248
    %v250 = vpop.f32.mrf.mxu0
    %251 = vdwg.mxu0
    %v252 = vadd.f32 %v177, %v249
    %v253 = vmul.f32 %v252, 0.5
    %v254 = vsel %vm172, %v252, %v253
    %v255 = vtanh.pop %v254
    %v256 = vmul.f32 %v255, 0.5
    %v257 = vadd.f32 %v256, 0.5
    %v258 = vsel %vm172, %v255, %v257
    %260 = vrot.lane.b32.xlu0 %v174, 32
    %v261 = vpop.permute.xlu0 %260
    %v263 = vmul.f32 %v258, %v261
    %265 = vrot.lane.b32.xlu0 %v258, 64
    %v266 = vpop.permute.xlu0 %265
    %v268 = vmul.f32 %v258, %v266
    %270 = vrot.lane.b32.xlu0 %v268, 32
    %v271 = vpop.permute.xlu0 %270
    %v273 = vadd.f32 %v263, %v271
    %v274 = vtanh.pop %v273
    %276 = vrot.lane.b32.xlu0 %v274, 64
    %v277 = vpop.permute.xlu0 %276
    %v279 = vmul.f32 %v258, %v277
    %281 = vrot.lane.b32.xlu0 %v279, 32
    %v282 = vpop.permute.xlu0 %281
    %285 = vrot.lane.b32.xlu0 %v175, 32
    %v286 = vpop.permute.xlu0 %285
    %v288 = vsel %vm178, %v282, %v286
    %vm289 = vcmask 523264
    %v291 = vsel %vm289, %v288, 0
    %293 = vmatprep.subr.mxu0 0.0
    %294 = vmatpush1.msra.mxu0 0.0
    %295 = vmatprep.subr.mxu0 0.0
    %296 = vmatpush1.msra.mxu0 0.0
    %297 = vmatprep.subr.mxu0 0.0
    %298 = vmatpush1.msra.mxu0 0.0
    %299 = vmatprep.subr.mxu0 0.0
    %300 = vmatpush1.msra.mxu0 0.0
    %301 = vmatprep.subr.mxu0 0.0
    %302 = vmatpush1.msra.mxu0 0.0
    %303 = vmatprep.subr.mxu0 0.0
    %304 = vmatpush1.msra.mxu0 0.0
    %305 = vmatprep.subr.mxu0 0.0
    %306 = vmatpush1.msra.mxu0 0.0
    %307 = vmatprep.subr.mxu0 0.0
    %308 = vmatpush1.msra.mxu0 0.0
    %309 = vmatprep.subr.mxu0 0.0
    %310 = vmatpush1.msra.mxu0 %v166
    %311 = vmatprep.subr.mxu0 0.0
    %312 = vmatpush1.msra.mxu0 %v165
    %313 = vmatprep.subr.mxu0 0.0
    %314 = vmatpush1.msra.mxu0 %v164
    %315 = vmatprep.subr.mxu0 0.0
    %316 = vmatpush1.msra.mxu0 %v163
    %317 = vmatprep.subr.mxu0 0.0
    %318 = vmatpush1.msra.mxu0 %v162
    %319 = vmatprep.subr.mxu0 0.0
    %320 = vmatpush1.msra.mxu0 %v161
    %321 = vmatprep.subr.mxu0 0.0
    %322 = vmatpush1.msra.mxu0 %v160
    %323 = vmatprep.subr.mxu0 0.0
    %324 = vmatpush1.msra.mxu0 %v159
    %325 = vmatprep.subr.mxu0 0.0
    %326 = vmatpush2.msra.mxu0 0.0
    %327 = vmatprep.subr.mxu0 0.0
    %328 = vmatpush2.msra.mxu0 0.0
    %329 = vmatprep.subr.mxu0 0.0
    %330 = vmatpush2.msra.mxu0 0.0
    %331 = vmatprep.subr.mxu0 0.0
    %332 = vmatpush2.msra.mxu0 0.0
    %333 = vmatprep.subr.mxu0 0.0
    %334 = vmatpush2.msra.mxu0 0.0
    %335 = vmatprep.subr.mxu0 0.0
    %336 = vmatpush2.msra.mxu0 0.0
    %337 = vmatprep.subr.mxu0 0.0
    %338 = vmatpush2.msra.mxu0 0.0
    %339 = vmatprep.subr.mxu0 0.0
    %340 = vmatpush2.msra.mxu0 0.0
    %341 = vmatprep.subr.mxu0 0.0
    %342 = vmatpush2.msra.mxu0 0.0
    %343 = vmatprep.subr.mxu0 0.0
    %344 = vmatpush2.msra.mxu0 0.0
    %345 = vmatprep.subr.mxu0 0.0
    %346 = vmatpush2.msra.mxu0 0.0
    %347 = vmatprep.subr.mxu0 0.0
    %348 = vmatpush2.msra.mxu0 0.0
    %349 = vmatprep.subr.mxu0 0.0
    %350 = vmatpush2.msra.mxu0 0.0
    %351 = vmatprep.subr.mxu0 0.0
    %352 = vmatpush2.msra.mxu0 0.0
    %353 = vmatprep.subr.mxu0 0.0
    %354 = vmatpush2.msra.mxu0 0.0
    %355 = vmatprep.subr.mxu0 0.0
    %356 = vmatpush2.msra.mxu0 0.0
    %357 = vmatprep.mubr.f32.mxu0 0.0
    %358 = vmatmul.mubr.f32.gmra.mxu0 %v291
    %v359 = vpop.f32.mrf.mxu0
    %v360 = vadd.f32 %v167, %v359
    %v361 = vpop.f32.mrf.mxu0
    %362 = vdwg.mxu0
    %v363 = vmul.f32 %v360, 0.5
    %v364 = vsel %vm172, %v360, %v363
    %v365 = vtanh.pop %v364
    %v366 = vmul.f32 %v365, 0.5
    %v367 = vadd.f32 %v366, 0.5
    %v368 = vsel %vm172, %v365, %v367
    %370 = vrot.lane.b32.xlu0 %v176, 32
    %v371 = vpop.permute.xlu0 %370
    %v373 = vmul.f32 %v368, %v371
    %375 = vrot.lane.b32.xlu0 %v368, 64
    %v376 = vpop.permute.xlu0 %375
    %v378 = vmul.f32 %v368, %v376
    %380 = vrot.lane.b32.xlu0 %v378, 32
    %v381 = vpop.permute.xlu0 %380
    %v383 = vadd.f32 %v373, %v381
    %v384 = vtanh.pop %v383
    %386 = vrot.lane.b32.xlu0 %v384, 64
    %v387 = vpop.permute.xlu0 %386
    %v389 = vmul.f32 %v368, %v387
    %391 = vrot.lane.b32.xlu0 %v389, 32
    %v392 = vpop.permute.xlu0 %391
    %vm394 = vcmask 253952
    %395 = vst.msk [vmem:[#allocation3] sm:$0x1] %vm394, %v392
    %v396 = vld [vmem:[#allocation2 + $0x1] sm:$0x1]
    %v397 = vsel %vm178, %v282, 0
    %399 = vmatprep.subr.mxu0 0.0
    %400 = vmatpush1.msra.mxu0 0.0
    %401 = vmatprep.subr.mxu0 0.0
    %402 = vmatpush1.msra.mxu0 0.0
    %403 = vmatprep.subr.mxu0 0.0
    %404 = vmatpush1.msra.mxu0 0.0
    %405 = vmatprep.subr.mxu0 0.0
    %406 = vmatpush1.msra.mxu0 0.0
    %407 = vmatprep.subr.mxu0 0.0
    %408 = vmatpush1.msra.mxu0 0.0
    %409 = vmatprep.subr.mxu0 0.0
    %410 = vmatpush1.msra.mxu0 0.0
    %411 = vmatprep.subr.mxu0 0.0
    %412 = vmatpush1.msra.mxu0 0.0
    %413 = vmatprep.subr.mxu0 0.0
    %414 = vmatpush1.msra.mxu0 0.0
    %415 = vmatprep.subr.mxu0 0.0
    %416 = vmatpush1.msra.mxu0 0.0
    %417 = vmatprep.subr.mxu0 0.0
    %418 = vmatpush1.msra.mxu0 0.0
    %419 = vmatprep.subr.mxu0 0.0
    %420 = vmatpush1.msra.mxu0 0.0
    %421 = vmatprep.subr.mxu0 0.0
    %422 = vmatpush1.msra.mxu0 0.0
    %423 = vmatprep.subr.mxu0 0.0
    %424 = vmatpush1.msra.mxu0 %v158
    %425 = vmatprep.subr.mxu0 0.0
    %426 = vmatpush1.msra.mxu0 %v157
    %427 = vmatprep.subr.mxu0 0.0
    %428 = vmatpush1.msra.mxu0 %v156
    %429 = vmatprep.subr.mxu0 0.0
    %430 = vmatpush1.msra.mxu0 %v155
    %431 = vmatprep.subr.mxu0 0.0
    %432 = vmatpush2.msra.mxu0 0.0
    %433 = vmatprep.subr.mxu0 0.0
    %434 = vmatpush2.msra.mxu0 0.0
    %435 = vmatprep.subr.mxu0 0.0
    %436 = vmatpush2.msra.mxu0 0.0
    %437 = vmatprep.subr.mxu0 0.0
    %438 = vmatpush2.msra.mxu0 0.0
    %439 = vmatprep.subr.mxu0 0.0
    %440 = vmatpush2.msra.mxu0 0.0
    %441 = vmatprep.subr.mxu0 0.0
    %442 = vmatpush2.msra.mxu0 0.0
    %443 = vmatprep.subr.mxu0 0.0
    %444 = vmatpush2.msra.mxu0 0.0
    %445 = vmatprep.subr.mxu0 0.0
    %446 = vmatpush2.msra.mxu0 0.0
    %447 = vmatprep.subr.mxu0 0.0
    %448 = vmatpush2.msra.mxu0 0.0
    %449 = vmatprep.subr.mxu0 0.0
    %450 = vmatpush2.msra.mxu0 0.0
    %451 = vmatprep.subr.mxu0 0.0
    %452 = vmatpush2.msra.mxu0 0.0
    %453 = vmatprep.subr.mxu0 0.0
    %454 = vmatpush2.msra.mxu0 0.0
    %455 = vmatprep.subr.mxu0 0.0
    %456 = vmatpush2.msra.mxu0 0.0
    %457 = vmatprep.subr.mxu0 0.0
    %458 = vmatpush2.msra.mxu0 0.0
    %459 = vmatprep.subr.mxu0 0.0
    %460 = vmatpush2.msra.mxu0 0.0
    %461 = vmatprep.subr.mxu0 0.0
    %462 = vmatpush2.msra.mxu0 0.0
    %463 = vmatprep.mubr.f32.mxu0 0.0
    %464 = vmatmul.mubr.f32.gmra.mxu0 %v397
    %v465 = vpop.f32.mrf.mxu0
    %v466 = vadd.f32 0.0, %v465
    %v467 = vpop.f32.mrf.mxu0
    %468 = vdwg.mxu0
    %v469 = vadd.f32 %v396, %v466
    %v470 = vmul.f32 %v469, 0.5
    %v471 = vsel %vm172, %v469, %v470
    %v472 = vtanh.pop %v471
    %v473 = vmul.f32 %v472, 0.5
    %v474 = vadd.f32 %v473, 0.5
    %v475 = vsel %vm172, %v472, %v474
    %v476 = vmul.f32 %v475, %v273
    %478 = vrot.lane.b32.xlu0 %v475, 64
    %v479 = vpop.permute.xlu0 %478
    %v481 = vmul.f32 %v475, %v479
    %483 = vrot.lane.b32.xlu0 %v481, 32
    %v484 = vpop.permute.xlu0 %483
    %v486 = vadd.f32 %v476, %v484
    %v487 = vtanh.pop %v486
    %489 = vrot.lane.b32.xlu0 %v487, 64
    %v490 = vpop.permute.xlu0 %489
    %v492 = vmul.f32 %v475, %v490
    %494 = vrot.lane.b32.xlu0 %v492, 32
    %v495 = vpop.permute.xlu0 %494
    %497 = vrot.lane.b32.xlu0 %v389, 64
    %v498 = vpop.permute.xlu0 %497
    %v500 = vsel %vm178, %v495, %v498
    %v502 = vsel %vm289, %v500, 0
    %504 = vmatprep.subr.mxu0 0.0
    %505 = vmatpush1.msra.mxu0 0.0
    %506 = vmatprep.subr.mxu0 0.0
    %507 = vmatpush1.msra.mxu0 0.0
    %508 = vmatprep.subr.mxu0 0.0
    %509 = vmatpush1.msra.mxu0 0.0
    %510 = vmatprep.subr.mxu0 0.0
    %511 = vmatpush1.msra.mxu0 0.0
    %512 = vmatprep.subr.mxu0 0.0
    %513 = vmatpush1.msra.mxu0 0.0
    %514 = vmatprep.subr.mxu0 0.0
    %515 = vmatpush1.msra.mxu0 0.0
    %516 = vmatprep.subr.mxu0 0.0
    %517 = vmatpush1.msra.mxu0 0.0
    %518 = vmatprep.subr.mxu0 0.0
    %519 = vmatpush1.msra.mxu0 0.0
    %520 = vmatprep.subr.mxu0 0.0
    %521 = vmatpush1.msra.mxu0 %v166
    %522 = vmatprep.subr.mxu0 0.0
    %523 = vmatpush1.msra.mxu0 %v165
    %524 = vmatprep.subr.mxu0 0.0
    %525 = vmatpush1.msra.mxu0 %v164
    %526 = vmatprep.subr.mxu0 0.0
    %527 = vmatpush1.msra.mxu0 %v163
    %528 = vmatprep.subr.mxu0 0.0
    %529 = vmatpush1.msra.mxu0 %v162
    %530 = vmatprep.subr.mxu0 0.0
    %531 = vmatpush1.msra.mxu0 %v161
    %532 = vmatprep.subr.mxu0 0.0
    %533 = vmatpush1.msra.mxu0 %v160
    %534 = vmatprep.subr.mxu0 0.0
    %535 = vmatpush1.msra.mxu0 %v159
    %536 = vmatprep.subr.mxu0 0.0
    %537 = vmatpush2.msra.mxu0 0.0
    %538 = vmatprep.subr.mxu0 0.0
    %539 = vmatpush2.msra.mxu0 0.0
    %540 = vmatprep.subr.mxu0 0.0
    %541 = vmatpush2.msra.mxu0 0.0
    %542 = vmatprep.subr.mxu0 0.0
    %543 = vmatpush2.msra.mxu0 0.0
    %544 = vmatprep.subr.mxu0 0.0
    %545 = vmatpush2.msra.mxu0 0.0
    %546 = vmatprep.subr.mxu0 0.0
    %547 = vmatpush2.msra.mxu0 0.0
    %548 = vmatprep.subr.mxu0 0.0
    %549 = vmatpush2.msra.mxu0 0.0
    %550 = vmatprep.subr.mxu0 0.0
    %551 = vmatpush2.msra.mxu0 0.0
    %552 = vmatprep.subr.mxu0 0.0
    %553 = vmatpush2.msra.mxu0 0.0
    %554 = vmatprep.subr.mxu0 0.0
    %555 = vmatpush2.msra.mxu0 0.0
    %556 = vmatprep.subr.mxu0 0.0
    %557 = vmatpush2.msra.mxu0 0.0
    %558 = vmatprep.subr.mxu0 0.0
    %559 = vmatpush2.msra.mxu0 0.0
    %560 = vmatprep.subr.mxu0 0.0
    %561 = vmatpush2.msra.mxu0 0.0
    %562 = vmatprep.subr.mxu0 0.0
    %563 = vmatpush2.msra.mxu0 0.0
    %564 = vmatprep.subr.mxu0 0.0
    %565 = vmatpush2.msra.mxu0 0.0
    %566 = vmatprep.subr.mxu0 0.0
    %567 = vmatpush2.msra.mxu0 0.0
    %568 = vmatprep.mubr.f32.mxu0 0.0
    %569 = vmatmul.mubr.f32.gmra.mxu0 %v502
    %v570 = vpop.f32.mrf.mxu0
    %v571 = vadd.f32 %v167, %v570
    %v572 = vpop.f32.mrf.mxu0
    %573 = vdwg.mxu0
    %v574 = vmul.f32 %v571, 0.5
    %v575 = vsel %vm172, %v571, %v574
    %v576 = vtanh.pop %v575
    %v577 = vmul.f32 %v576, 0.5
    %v578 = vadd.f32 %v577, 0.5
    %v579 = vsel %vm172, %v576, %v578
    %v580 = vmul.f32 %v579, %v383
    %582 = vrot.lane.b32.xlu0 %v579, 64
    %v583 = vpop.permute.xlu0 %582
    %v585 = vmul.f32 %v579, %v583
    %587 = vrot.lane.b32.xlu0 %v585, 32
    %v588 = vpop.permute.xlu0 %587
    %v590 = vadd.f32 %v580, %v588
    %v591 = vtanh.pop %v590
    %593 = vrot.lane.b32.xlu0 %v591, 64
    %v594 = vpop.permute.xlu0 %593
    %v596 = vmul.f32 %v579, %v594
    %598 = vrot.lane.b32.xlu0 %v596, 32
    %v599 = vpop.permute.xlu0 %598
    %601 = vst.msk [vmem:[#allocation3 + $0x1] sm:$0x1] %vm394, %v599
    %v602 = vld [vmem:[#allocation2 + $0x2] sm:$0x1]
    %v603 = vsel %vm178, %v495, 0
    %605 = vmatprep.subr.mxu0 0.0
    %606 = vmatpush1.msra.mxu0 0.0
    %607 = vmatprep.subr.mxu0 0.0
    %608 = vmatpush1.msra.mxu0 0.0
    %609 = vmatprep.subr.mxu0 0.0
    %610 = vmatpush1.msra.mxu0 0.0
    %611 = vmatprep.subr.mxu0 0.0
    %612 = vmatpush1.msra.mxu0 0.0
    %613 = vmatprep.subr.mxu0 0.0
    %614 = vmatpush1.msra.mxu0 0.0
    %615 = vmatprep.subr.mxu0 0.0
    %616 = vmatpush1.msra.mxu0 0.0
    %617 = vmatprep.subr.mxu0 0.0
    %618 = vmatpush1.msra.mxu0 0.0
    %619 = vmatprep.subr.mxu0 0.0
    %620 = vmatpush1.msra.mxu0 0.0
    %621 = vmatprep.subr.mxu0 0.0
    %622 = vmatpush1.msra.mxu0 0.0
    %623 = vmatprep.subr.mxu0 0.0
    %624 = vmatpush1.msra.mxu0 0.0
    %625 = vmatprep.subr.mxu0 0.0
    %626 = vmatpush1.msra.mxu0 0.0
    %627 = vmatprep.subr.mxu0 0.0
    %628 = vmatpush1.msra.mxu0 0.0
    %629 = vmatprep.subr.mxu0 0.0
    %630 = vmatpush1.msra.mxu0 %v158
    %631 = vmatprep.subr.mxu0 0.0
    %632 = vmatpush1.msra.mxu0 %v157
    %633 = vmatprep.subr.mxu0 0.0
    %634 = vmatpush1.msra.mxu0 %v156
    %635 = vmatprep.subr.mxu0 0.0
    %636 = vmatpush1.msra.mxu0 %v155
    %637 = vmatprep.subr.mxu0 0.0
    %638 = vmatpush2.msra.mxu0 0.0
    %639 = vmatprep.subr.mxu0 0.0
    %640 = vmatpush2.msra.mxu0 0.0
    %641 = vmatprep.subr.mxu0 0.0
    %642 = vmatpush2.msra.mxu0 0.0
    %643 = vmatprep.subr.mxu0 0.0
    %644 = vmatpush2.msra.mxu0 0.0
    %645 = vmatprep.subr.mxu0 0.0
    %646 = vmatpush2.msra.mxu0 0.0
    %647 = vmatprep.subr.mxu0 0.0
    %648 = vmatpush2.msra.mxu0 0.0
    %649 = vmatprep.subr.mxu0 0.0
    %650 = vmatpush2.msra.mxu0 0.0
    %651 = vmatprep.subr.mxu0 0.0
    %652 = vmatpush2.msra.mxu0 0.0
    %653 = vmatprep.subr.mxu0 0.0
    %654 = vmatpush2.msra.mxu0 0.0
    %655 = vmatprep.subr.mxu0 0.0
    %656 = vmatpush2.msra.mxu0 0.0
    %657 = vmatprep.subr.mxu0 0.0
    %658 = vmatpush2.msra.mxu0 0.0
    %659 = vmatprep.subr.mxu0 0.0
    %660 = vmatpush2.msra.mxu0 0.0
    %661 = vmatprep.subr.mxu0 0.0
    %662 = vmatpush2.msra.mxu0 0.0
    %663 = vmatprep.subr.mxu0 0.0
    %664 = vmatpush2.msra.mxu0 0.0
    %665 = vmatprep.subr.mxu0 0.0
    %666 = vmatpush2.msra.mxu0 0.0
    %667 = vmatprep.subr.mxu0 0.0
    %668 = vmatpush2.msra.mxu0 0.0
    %669 = vmatprep.mubr.f32.mxu0 0.0
    %670 = vmatmul.mubr.f32.gmra.mxu0 %v603
    %v671 = vpop.f32.mrf.mxu0
    %v672 = vadd.f32 0.0, %v671
    %v673 = vpop.f32.mrf.mxu0
    %674 = vdwg.mxu0
    %v675 = vadd.f32 %v602, %v672
    %v676 = vmul.f32 %v675, 0.5
    %v677 = vsel %vm172, %v675, %v676
    %v678 = vtanh.pop %v677
    %v679 = vmul.f32 %v678, 0.5
    %v680 = vadd.f32 %v679, 0.5
    %v681 = vsel %vm172, %v678, %v680
    %v682 = vmul.f32 %v681, %v486
    %684 = vrot.lane.b32.xlu0 %v681, 64
    %v685 = vpop.permute.xlu0 %684
    %v687 = vmul.f32 %v681, %v685
    %689 = vrot.lane.b32.xlu0 %v687, 32
    %v690 = vpop.permute.xlu0 %689
    %v692 = vadd.f32 %v682, %v690
    %v693 = vtanh.pop %v692
    %695 = vrot.lane.b32.xlu0 %v693, 64
    %v696 = vpop.permute.xlu0 %695
    %v698 = vmul.f32 %v681, %v696
    %700 = vrot.lane.b32.xlu0 %v698, 32
    %v701 = vpop.permute.xlu0 %700
    %703 = vrot.lane.b32.xlu0 %v596, 64
    %v704 = vpop.permute.xlu0 %703
    %v706 = vsel %vm178, %v701, %v704
    %v708 = vsel %vm289, %v706, 0
    %710 = vmatprep.subr.mxu0 0.0
    %711 = vmatpush1.msra.mxu0 0.0
    %712 = vmatprep.subr.mxu0 0.0
    %713 = vmatpush1.msra.mxu0 0.0
    %714 = vmatprep.subr.mxu0 0.0
    %715 = vmatpush1.msra.mxu0 0.0
    %716 = vmatprep.subr.mxu0 0.0
    %717 = vmatpush1.msra.mxu0 0.0
    %718 = vmatprep.subr.mxu0 0.0
    %719 = vmatpush1.msra.mxu0 0.0
    %720 = vmatprep.subr.mxu0 0.0
    %721 = vmatpush1.msra.mxu0 0.0
    %722 = vmatprep.subr.mxu0 0.0
    %723 = vmatpush1.msra.mxu0 0.0
    %724 = vmatprep.subr.mxu0 0.0
    %725 = vmatpush1.msra.mxu0 0.0
    %726 = vmatprep.subr.mxu0 0.0
    %727 = vmatpush1.msra.mxu0 %v166
    %728 = vmatprep.subr.mxu0 0.0
    %729 = vmatpush1.msra.mxu0 %v165
    %730 = vmatprep.subr.mxu0 0.0
    %731 = vmatpush1.msra.mxu0 %v164
    %732 = vmatprep.subr.mxu0 0.0
    %733 = vmatpush1.msra.mxu0 %v163
    %734 = vmatprep.subr.mxu0 0.0
    %735 = vmatpush1.msra.mxu0 %v162
    %736 = vmatprep.subr.mxu0 0.0
    %737 = vmatpush1.msra.mxu0 %v161
    %738 = vmatprep.subr.mxu0 0.0
    %739 = vmatpush1.msra.mxu0 %v160
    %740 = vmatprep.subr.mxu0 0.0
    %741 = vmatpush1.msra.mxu0 %v159
    %742 = vmatprep.subr.mxu0 0.0
    %743 = vmatpush2.msra.mxu0 0.0
    %744 = vmatprep.subr.mxu0 0.0
    %745 = vmatpush2.msra.mxu0 0.0
    %746 = vmatprep.subr.mxu0 0.0
    %747 = vmatpush2.msra.mxu0 0.0
    %748 = vmatprep.subr.mxu0 0.0
    %749 = vmatpush2.msra.mxu0 0.0
    %750 = vmatprep.subr.mxu0 0.0
    %751 = vmatpush2.msra.mxu0 0.0
    %752 = vmatprep.subr.mxu0 0.0
    %753 = vmatpush2.msra.mxu0 0.0
    %754 = vmatprep.subr.mxu0 0.0
    %755 = vmatpush2.msra.mxu0 0.0
    %756 = vmatprep.subr.mxu0 0.0
    %757 = vmatpush2.msra.mxu0 0.0
    %758 = vmatprep.subr.mxu0 0.0
    %759 = vmatpush2.msra.mxu0 0.0
    %760 = vmatprep.subr.mxu0 0.0
    %761 = vmatpush2.msra.mxu0 0.0
    %762 = vmatprep.subr.mxu0 0.0
    %763 = vmatpush2.msra.mxu0 0.0
    %764 = vmatprep.subr.mxu0 0.0
    %765 = vmatpush2.msra.mxu0 0.0
    %766 = vmatprep.subr.mxu0 0.0
    %767 = vmatpush2.msra.mxu0 0.0
    %768 = vmatprep.subr.mxu0 0.0
    %769 = vmatpush2.msra.mxu0 0.0
    %770 = vmatprep.subr.mxu0 0.0
    %771 = vmatpush2.msra.mxu0 0.0
    %772 = vmatprep.subr.mxu0 0.0
    %773 = vmatpush2.msra.mxu0 0.0
    %774 = vmatprep.mubr.f32.mxu0 0.0
    %775 = vmatmul.mubr.f32.gmra.mxu0 %v708
    %v776 = vpop.f32.mrf.mxu0
    %v777 = vadd.f32 %v167, %v776
    %v778 = vpop.f32.mrf.mxu0
    %779 = vdwg.mxu0
    %v780 = vmul.f32 %v777, 0.5
    %v781 = vsel %vm172, %v777, %v780
    %v782 = vtanh.pop %v781
    %v783 = vmul.f32 %v782, 0.5
    %v784 = vadd.f32 %v783, 0.5
    %v785 = vsel %vm172, %v782, %v784
    %v786 = vmul.f32 %v785, %v590
    %788 = vrot.lane.b32.xlu0 %v785, 64
    %v789 = vpop.permute.xlu0 %788
    %v791 = vmul.f32 %v785, %v789
    %793 = vrot.lane.b32.xlu0 %v791, 32
    %v794 = vpop.permute.xlu0 %793
    %v796 = vadd.f32 %v786, %v794
    %v797 = vtanh.pop %v796
    %799 = vrot.lane.b32.xlu0 %v797, 64
    %v800 = vpop.permute.xlu0 %799
    %v802 = vmul.f32 %v785, %v800
    %804 = vrot.lane.b32.xlu0 %v802, 32
    %v805 = vpop.permute.xlu0 %804
    %807 = vst.msk [vmem:[#allocation3 + $0x2] sm:$0x1] %vm394, %v805
    %v808 = vld [vmem:[#allocation2 + $0x3] sm:$0x1]
    %v809 = vsel %vm178, %v701, 0
    %811 = vmatprep.subr.mxu0 0.0
    %812 = vmatpush1.msra.mxu0 0.0
    %813 = vmatprep.subr.mxu0 0.0
    %814 = vmatpush1.msra.mxu0 0.0
    %815 = vmatprep.subr.mxu0 0.0
    %816 = vmatpush1.msra.mxu0 0.0
    %817 = vmatprep.subr.mxu0 0.0
    %818 = vmatpush1.msra.mxu0 0.0
    %819 = vmatprep.subr.mxu0 0.0
    %820 = vmatpush1.msra.mxu0 0.0
    %821 = vmatprep.subr.mxu0 0.0
    %822 = vmatpush1.msra.mxu0 0.0
    %823 = vmatprep.subr.mxu0 0.0
    %824 = vmatpush1.msra.mxu0 0.0
    %825 = vmatprep.subr.mxu0 0.0
    %826 = vmatpush1.msra.mxu0 0.0
    %827 = vmatprep.subr.mxu0 0.0
    %828 = vmatpush1.msra.mxu0 0.0
    %829 = vmatprep.subr.mxu0 0.0
    %830 = vmatpush1.msra.mxu0 0.0
    %831 = vmatprep.subr.mxu0 0.0
    %832 = vmatpush1.msra.mxu0 0.0
    %833 = vmatprep.subr.mxu0 0.0
    %834 = vmatpush1.msra.mxu0 0.0
    %835 = vmatprep.subr.mxu0 0.0
    %836 = vmatpush1.msra.mxu0 %v158
    %837 = vmatprep.subr.mxu0 0.0
    %838 = vmatpush1.msra.mxu0 %v157
    %839 = vmatprep.subr.mxu0 0.0
    %840 = vmatpush1.msra.mxu0 %v156
    %841 = vmatprep.subr.mxu0 0.0
    %842 = vmatpush1.msra.mxu0 %v155
    %843 = vmatprep.subr.mxu0 0.0
    %844 = vmatpush2.msra.mxu0 0.0
    %845 = vmatprep.subr.mxu0 0.0
    %846 = vmatpush2.msra.mxu0 0.0
    %847 = vmatprep.subr.mxu0 0.0
    %848 = vmatpush2.msra.mxu0 0.0
    %849 = vmatprep.subr.mxu0 0.0
    %850 = vmatpush2.msra.mxu0 0.0
    %851 = vmatprep.subr.mxu0 0.0
    %852 = vmatpush2.msra.mxu0 0.0
    %853 = vmatprep.subr.mxu0 0.0
    %854 = vmatpush2.msra.mxu0 0.0
    %855 = vmatprep.subr.mxu0 0.0
    %856 = vmatpush2.msra.mxu0 0.0
    %857 = vmatprep.subr.mxu0 0.0
    %858 = vmatpush2.msra.mxu0 0.0
    %859 = vmatprep.subr.mxu0 0.0
    %860 = vmatpush2.msra.mxu0 0.0
    %861 = vmatprep.subr.mxu0 0.0
    %862 = vmatpush2.msra.mxu0 0.0
    %863 = vmatprep.subr.mxu0 0.0
    %864 = vmatpush2.msra.mxu0 0.0
    %865 = vmatprep.subr.mxu0 0.0
    %866 = vmatpush2.msra.mxu0 0.0
    %867 = vmatprep.subr.mxu0 0.0
    %868 = vmatpush2.msra.mxu0 0.0
    %869 = vmatprep.subr.mxu0 0.0
    %870 = vmatpush2.msra.mxu0 0.0
    %871 = vmatprep.subr.mxu0 0.0
    %872 = vmatpush2.msra.mxu0 0.0
    %873 = vmatprep.subr.mxu0 0.0
    %874 = vmatpush2.msra.mxu0 0.0
    %875 = vmatprep.mubr.f32.mxu0 0.0
    %876 = vmatmul.mubr.f32.gmra.mxu0 %v809
    %v877 = vpop.f32.mrf.mxu0
    %v878 = vadd.f32 0.0, %v877
    %v879 = vpop.f32.mrf.mxu0
    %880 = vdwg.mxu0
    %v881 = vadd.f32 %v808, %v878
    %v882 = vmul.f32 %v881, 0.5
    %v883 = vsel %vm172, %v881, %v882
    %v884 = vtanh.pop %v883
    %v885 = vmul.f32 %v884, 0.5
    %v886 = vadd.f32 %v885, 0.5
    %v887 = vsel %vm172, %v884, %v886
    %v888 = vmul.f32 %v887, %v692
    %890 = vrot.lane.b32.xlu0 %v887, 64
    %v891 = vpop.permute.xlu0 %890
    %v893 = vmul.f32 %v887, %v891
    %895 = vrot.lane.b32.xlu0 %v893, 32
    %v896 = vpop.permute.xlu0 %895
    %v898 = vadd.f32 %v888, %v896
    %v899 = vtanh.pop %v898
    %901 = vrot.lane.b32.xlu0 %v899, 64
    %v902 = vpop.permute.xlu0 %901
    %v904 = vmul.f32 %v887, %v902
    %906 = vrot.lane.b32.xlu0 %v904, 32
    %v907 = vpop.permute.xlu0 %906
    %909 = vrot.lane.b32.xlu0 %v802, 64
    %v910 = vpop.permute.xlu0 %909
    %v912 = vsel %vm178, %v907, %v910
    %v914 = vsel %vm289, %v912, 0
    %916 = vmatprep.subr.mxu0 0.0
    %917 = vmatpush1.msra.mxu0 0.0
    %918 = vmatprep.subr.mxu0 0.0
    %919 = vmatpush1.msra.mxu0 0.0
    %920 = vmatprep.subr.mxu0 0.0
    %921 = vmatpush1.msra.mxu0 0.0
    %922 = vmatprep.subr.mxu0 0.0
    %923 = vmatpush1.msra.mxu0 0.0
    %924 = vmatprep.subr.mxu0 0.0
    %925 = vmatpush1.msra.mxu0 0.0
    %926 = vmatprep.subr.mxu0 0.0
    %927 = vmatpush1.msra.mxu0 0.0
    %928 = vmatprep.subr.mxu0 0.0
    %929 = vmatpush1.msra.mxu0 0.0
    %930 = vmatprep.subr.mxu0 0.0
    %931 = vmatpush1.msra.mxu0 0.0
    %932 = vmatprep.subr.mxu0 0.0
    %933 = vmatpush1.msra.mxu0 %v166
    %934 = vmatprep.subr.mxu0 0.0
    %935 = vmatpush1.msra.mxu0 %v165
    %936 = vmatprep.subr.mxu0 0.0
    %937 = vmatpush1.msra.mxu0 %v164
    %938 = vmatprep.subr.mxu0 0.0
    %939 = vmatpush1.msra.mxu0 %v163
    %940 = vmatprep.subr.mxu0 0.0
    %941 = vmatpush1.msra.mxu0 %v162
    %942 = vmatprep.subr.mxu0 0.0
    %943 = vmatpush1.msra.mxu0 %v161
    %944 = vmatprep.subr.mxu0 0.0
    %945 = vmatpush1.msra.mxu0 %v160
    %946 = vmatprep.subr.mxu0 0.0
    %947 = vmatpush1.msra.mxu0 %v159
    %948 = vmatprep.subr.mxu0 0.0
    %949 = vmatpush2.msra.mxu0 0.0
    %950 = vmatprep.subr.mxu0 0.0
    %951 = vmatpush2.msra.mxu0 0.0
    %952 = vmatprep.subr.mxu0 0.0
    %953 = vmatpush2.msra.mxu0 0.0
    %954 = vmatprep.subr.mxu0 0.0
    %955 = vmatpush2.msra.mxu0 0.0
    %956 = vmatprep.subr.mxu0 0.0
    %957 = vmatpush2.msra.mxu0 0.0
    %958 = vmatprep.subr.mxu0 0.0
    %959 = vmatpush2.msra.mxu0 0.0
    %960 = vmatprep.subr.mxu0 0.0
    %961 = vmatpush2.msra.mxu0 0.0
    %962 = vmatprep.subr.mxu0 0.0
    %963 = vmatpush2.msra.mxu0 0.0
    %964 = vmatprep.subr.mxu0 0.0
    %965 = vmatpush2.msra.mxu0 0.0
    %966 = vmatprep.subr.mxu0 0.0
    %967 = vmatpush2.msra.mxu0 0.0
    %968 = vmatprep.subr.mxu0 0.0
    %969 = vmatpush2.msra.mxu0 0.0
    %970 = vmatprep.subr.mxu0 0.0
    %971 = vmatpush2.msra.mxu0 0.0
    %972 = vmatprep.subr.mxu0 0.0
    %973 = vmatpush2.msra.mxu0 0.0
    %974 = vmatprep.subr.mxu0 0.0
    %975 = vmatpush2.msra.mxu0 0.0
    %976 = vmatprep.subr.mxu0 0.0
    %977 = vmatpush2.msra.mxu0 0.0
    %978 = vmatprep.subr.mxu0 0.0
    %979 = vmatpush2.msra.mxu0 0.0
    %980 = vmatprep.mubr.f32.mxu0 0.0
    %981 = vmatmul.mubr.f32.gmra.mxu0 %v914
    %v982 = vpop.f32.mrf.mxu0
    %v983 = vadd.f32 %v167, %v982
    %v984 = vpop.f32.mrf.mxu0
    %985 = vdwg.mxu0
    %v986 = vmul.f32 %v983, 0.5
    %v987 = vsel %vm172, %v983, %v986
    %v988 = vtanh.pop %v987
    %v989 = vmul.f32 %v988, 0.5
    %v990 = vadd.f32 %v989, 0.5
    %v991 = vsel %vm172, %v988, %v990
    %v992 = vmul.f32 %v991, %v796
    %994 = vrot.lane.b32.xlu0 %v991, 64
    %v995 = vpop.permute.xlu0 %994
    %v997 = vmul.f32 %v991, %v995
    %999 = vrot.lane.b32.xlu0 %v997, 32
    %v1000 = vpop.permute.xlu0 %999
    %v1002 = vadd.f32 %v992, %v1000
    %v1003 = vtanh.pop %v1002
    %1005 = vrot.lane.b32.xlu0 %v1003, 64
    %v1006 = vpop.permute.xlu0 %1005
    %v1008 = vmul.f32 %v991, %v1006
    %1010 = vrot.lane.b32.xlu0 %v1008, 32
    %v1011 = vpop.permute.xlu0 %1010
    %1013 = vst.msk [vmem:[#allocation3 + $0x3] sm:$0x1] %vm394, %v1011
    %v1014 = vld [vmem:[#allocation2 + $0x4] sm:$0x1]
    %v1015 = vsel %vm178, %v907, 0
    %1017 = vmatprep.subr.mxu0 0.0
    %1018 = vmatpush1.msra.mxu0 0.0
    %1019 = vmatprep.subr.mxu0 0.0
    %1020 = vmatpush1.msra.mxu0 0.0
    %1021 = vmatprep.subr.mxu0 0.0
    %1022 = vmatpush1.msra.mxu0 0.0
    %1023 = vmatprep.subr.mxu0 0.0
    %1024 = vmatpush1.msra.mxu0 0.0
    %1025 = vmatprep.subr.mxu0 0.0
    %1026 = vmatpush1.msra.mxu0 0.0
    %1027 = vmatprep.subr.mxu0 0.0
    %1028 = vmatpush1.msra.mxu0 0.0
    %1029 = vmatprep.subr.mxu0 0.0
    %1030 = vmatpush1.msra.mxu0 0.0
    %1031 = vmatprep.subr.mxu0 0.0
    %1032 = vmatpush1.msra.mxu0 0.0
    %1033 = vmatprep.subr.mxu0 0.0
    %1034 = vmatpush1.msra.mxu0 0.0
    %1035 = vmatprep.subr.mxu0 0.0
    %1036 = vmatpush1.msra.mxu0 0.0
    %1037 = vmatprep.subr.mxu0 0.0
    %1038 = vmatpush1.msra.mxu0 0.0
    %1039 = vmatprep.subr.mxu0 0.0
    %1040 = vmatpush1.msra.mxu0 0.0
    %1041 = vmatprep.subr.mxu0 0.0
    %1042 = vmatpush1.msra.mxu0 %v158
    %1043 = vmatprep.subr.mxu0 0.0
    %1044 = vmatpush1.msra.mxu0 %v157
    %1045 = vmatprep.subr.mxu0 0.0
    %1046 = vmatpush1.msra.mxu0 %v156
    %1047 = vmatprep.subr.mxu0 0.0
    %1048 = vmatpush1.msra.mxu0 %v155
    %1049 = vmatprep.subr.mxu0 0.0
    %1050 = vmatpush2.msra.mxu0 0.0
    %1051 = vmatprep.subr.mxu0 0.0
    %1052 = vmatpush2.msra.mxu0 0.0
    %1053 = vmatprep.subr.mxu0 0.0
    %1054 = vmatpush2.msra.mxu0 0.0
    %1055 = vmatprep.subr.mxu0 0.0
    %1056 = vmatpush2.msra.mxu0 0.0
    %1057 = vmatprep.subr.mxu0 0.0
    %1058 = vmatpush2.msra.mxu0 0.0
    %1059 = vmatprep.subr.mxu0 0.0
    %1060 = vmatpush2.msra.mxu0 0.0
    %1061 = vmatprep.subr.mxu0 0.0
    %1062 = vmatpush2.msra.mxu0 0.0
    %1063 = vmatprep.subr.mxu0 0.0
    %1064 = vmatpush2.msra.mxu0 0.0
    %1065 = vmatprep.subr.mxu0 0.0
    %1066 = vmatpush2.msra.mxu0 0.0
    %1067 = vmatprep.subr.mxu0 0.0
    %1068 = vmatpush2.msra.mxu0 0.0
    %1069 = vmatprep.subr.mxu0 0.0
    %1070 = vmatpush2.msra.mxu0 0.0
    %1071 = vmatprep.subr.mxu0 0.0
    %1072 = vmatpush2.msra.mxu0 0.0
    %1073 = vmatprep.subr.mxu0 0.0
    %1074 = vmatpush2.msra.mxu0 0.0
    %1075 = vmatprep.subr.mxu0 0.0
    %1076 = vmatpush2.msra.mxu0 0.0
    %1077 = vmatprep.subr.mxu0 0.0
    %1078 = vmatpush2.msra.mxu0 0.0
    %1079 = vmatprep.subr.mxu0 0.0
    %1080 = vmatpush2.msra.mxu0 0.0
    %1081 = vmatprep.mubr.f32.mxu0 0.0
    %1082 = vmatmul.mubr.f32.gmra.mxu0 %v1015
    %v1083 = vpop.f32.mrf.mxu0
    %v1084 = vadd.f32 0.0, %v1083
    %v1085 = vpop.f32.mrf.mxu0
    %1086 = vdwg.mxu0
    %v1087 = vadd.f32 %v1014, %v1084
    %v1088 = vmul.f32 %v1087, 0.5
    %v1089 = vsel %vm172, %v1087, %v1088
    %v1090 = vtanh.pop %v1089
    %v1091 = vmul.f32 %v1090, 0.5
    %v1092 = vadd.f32 %v1091, 0.5
    %v1093 = vsel %vm172, %v1090, %v1092
    %v1094 = vmul.f32 %v1093, %v898
    %1096 = vrot.lane.b32.xlu0 %v1093, 64
    %v1097 = vpop.permute.xlu0 %1096
    %v1099 = vmul.f32 %v1093, %v1097
    %1101 = vrot.lane.b32.xlu0 %v1099, 32
    %v1102 = vpop.permute.xlu0 %1101
    %v1104 = vadd.f32 %v1094, %v1102
    %v1105 = vtanh.pop %v1104
    %1107 = vrot.lane.b32.xlu0 %v1105, 64
    %v1108 = vpop.permute.xlu0 %1107
    %v1110 = vmul.f32 %v1093, %v1108
    %1112 = vrot.lane.b32.xlu0 %v1110, 32
    %v1113 = vpop.permute.xlu0 %1112
    %1115 = vrot.lane.b32.xlu0 %v1008, 64
    %v1116 = vpop.permute.xlu0 %1115
    %v1118 = vsel %vm178, %v1113, %v1116
    %v1120 = vsel %vm289, %v1118, 0
    %1122 = vmatprep.subr.mxu0 0.0
    %1123 = vmatpush1.msra.mxu0 0.0
    %1124 = vmatprep.subr.mxu0 0.0
    %1125 = vmatpush1.msra.mxu0 0.0
    %1126 = vmatprep.subr.mxu0 0.0
    %1127 = vmatpush1.msra.mxu0 0.0
    %1128 = vmatprep.subr.mxu0 0.0
    %1129 = vmatpush1.msra.mxu0 0.0
    %1130 = vmatprep.subr.mxu0 0.0
    %1131 = vmatpush1.msra.mxu0 0.0
    %1132 = vmatprep.subr.mxu0 0.0
    %1133 = vmatpush1.msra.mxu0 0.0
    %1134 = vmatprep.subr.mxu0 0.0
    %1135 = vmatpush1.msra.mxu0 0.0
    %1136 = vmatprep.subr.mxu0 0.0
    %1137 = vmatpush1.msra.mxu0 0.0
    %1138 = vmatprep.subr.mxu0 0.0
    %1139 = vmatpush1.msra.mxu0 %v166
    %1140 = vmatprep.subr.mxu0 0.0
    %1141 = vmatpush1.msra.mxu0 %v165
    %1142 = vmatprep.subr.mxu0 0.0
    %1143 = vmatpush1.msra.mxu0 %v164
    %1144 = vmatprep.subr.mxu0 0.0
    %1145 = vmatpush1.msra.mxu0 %v163
    %1146 = vmatprep.subr.mxu0 0.0
    %1147 = vmatpush1.msra.mxu0 %v162
    %1148 = vmatprep.subr.mxu0 0.0
    %1149 = vmatpush1.msra.mxu0 %v161
    %1150 = vmatprep.subr.mxu0 0.0
    %1151 = vmatpush1.msra.mxu0 %v160
    %1152 = vmatprep.subr.mxu0 0.0
    %1153 = vmatpush1.msra.mxu0 %v159
    %1154 = vmatprep.subr.mxu0 0.0
    %1155 = vmatpush2.msra.mxu0 0.0
    %1156 = vmatprep.subr.mxu0 0.0
    %1157 = vmatpush2.msra.mxu0 0.0
    %1158 = vmatprep.subr.mxu0 0.0
    %1159 = vmatpush2.msra.mxu0 0.0
    %1160 = vmatprep.subr.mxu0 0.0
    %1161 = vmatpush2.msra.mxu0 0.0
    %1162 = vmatprep.subr.mxu0 0.0
    %1163 = vmatpush2.msra.mxu0 0.0
    %1164 = vmatprep.subr.mxu0 0.0
    %1165 = vmatpush2.msra.mxu0 0.0
    %1166 = vmatprep.subr.mxu0 0.0
    %1167 = vmatpush2.msra.mxu0 0.0
    %1168 = vmatprep.subr.mxu0 0.0
    %1169 = vmatpush2.msra.mxu0 0.0
    %1170 = vmatprep.subr.mxu0 0.0
    %1171 = vmatpush2.msra.mxu0 0.0
    %1172 = vmatprep.subr.mxu0 0.0
    %1173 = vmatpush2.msra.mxu0 0.0
    %1174 = vmatprep.subr.mxu0 0.0
    %1175 = vmatpush2.msra.mxu0 0.0
    %1176 = vmatprep.subr.mxu0 0.0
    %1177 = vmatpush2.msra.mxu0 0.0
    %1178 = vmatprep.subr.mxu0 0.0
    %1179 = vmatpush2.msra.mxu0 0.0
    %1180 = vmatprep.subr.mxu0 0.0
    %1181 = vmatpush2.msra.mxu0 0.0
    %1182 = vmatprep.subr.mxu0 0.0
    %1183 = vmatpush2.msra.mxu0 0.0
    %1184 = vmatprep.subr.mxu0 0.0
    %1185 = vmatpush2.msra.mxu0 0.0
    %1186 = vmatprep.mubr.f32.mxu0 0.0
    %1187 = vmatmul.mubr.f32.gmra.mxu0 %v1120
    %v1188 = vpop.f32.mrf.mxu0
    %v1189 = vadd.f32 %v167, %v1188
    %v1190 = vpop.f32.mrf.mxu0
    %1191 = vdwg.mxu0
    %v1192 = vmul.f32 %v1189, 0.5
    %v1193 = vsel %vm172, %v1189, %v1192
    %v1194 = vtanh.pop %v1193
    %v1195 = vmul.f32 %v1194, 0.5
    %v1196 = vadd.f32 %v1195, 0.5
    %v1197 = vsel %vm172, %v1194, %v1196
    %v1198 = vmul.f32 %v1197, %v1002
    %1200 = vrot.lane.b32.xlu0 %v1197, 64
    %v1201 = vpop.permute.xlu0 %1200
    %v1203 = vmul.f32 %v1197, %v1201
    %1205 = vrot.lane.b32.xlu0 %v1203, 32
    %v1206 = vpop.permute.xlu0 %1205
    %v1208 = vadd.f32 %v1198, %v1206
    %v1209 = vtanh.pop %v1208
    %1211 = vrot.lane.b32.xlu0 %v1209, 64
    %v1212 = vpop.permute.xlu0 %1211
    %v1214 = vmul.f32 %v1197, %v1212
    %1216 = vrot.lane.b32.xlu0 %v1214, 32
    %v1217 = vpop.permute.xlu0 %1216
    %1219 = vst.msk [vmem:[#allocation3 + $0x4] sm:$0x1] %vm394, %v1217
    %v1220 = vld [vmem:[#allocation2 + $0x5] sm:$0x1]
    %v1221 = vsel %vm178, %v1113, 0
    %1223 = vmatprep.subr.mxu0 0.0
    %1224 = vmatpush1.msra.mxu0 0.0
    %1225 = vmatprep.subr.mxu0 0.0
    %1226 = vmatpush1.msra.mxu0 0.0
    %1227 = vmatprep.subr.mxu0 0.0
    %1228 = vmatpush1.msra.mxu0 0.0
    %1229 = vmatprep.subr.mxu0 0.0
    %1230 = vmatpush1.msra.mxu0 0.0
    %1231 = vmatprep.subr.mxu0 0.0
    %1232 = vmatpush1.msra.mxu0 0.0
    %1233 = vmatprep.subr.mxu0 0.0
    %1234 = vmatpush1.msra.mxu0 0.0
    %1235 = vmatprep.subr.mxu0 0.0
    %1236 = vmatpush1.msra.mxu0 0.0
    %1237 = vmatprep.subr.mxu0 0.0
    %1238 = vmatpush1.msra.mxu0 0.0
    %1239 = vmatprep.subr.mxu0 0.0
    %1240 = vmatpush1.msra.mxu0 0.0
    %1241 = vmatprep.subr.mxu0 0.0
    %1242 = vmatpush1.msra.mxu0 0.0
    %1243 = vmatprep.subr.mxu0 0.0
    %1244 = vmatpush1.msra.mxu0 0.0
    %1245 = vmatprep.subr.mxu0 0.0
    %1246 = vmatpush1.msra.mxu0 0.0
    %1247 = vmatprep.subr.mxu0 0.0
    %1248 = vmatpush1.msra.mxu0 %v158
    %1249 = vmatprep.subr.mxu0 0.0
    %1250 = vmatpush1.msra.mxu0 %v157
    %1251 = vmatprep.subr.mxu0 0.0
    %1252 = vmatpush1.msra.mxu0 %v156
    %1253 = vmatprep.subr.mxu0 0.0
    %1254 = vmatpush1.msra.mxu0 %v155
    %1255 = vmatprep.subr.mxu0 0.0
    %1256 = vmatpush2.msra.mxu0 0.0
    %1257 = vmatprep.subr.mxu0 0.0
    %1258 = vmatpush2.msra.mxu0 0.0
    %1259 = vmatprep.subr.mxu0 0.0
    %1260 = vmatpush2.msra.mxu0 0.0
    %1261 = vmatprep.subr.mxu0 0.0
    %1262 = vmatpush2.msra.mxu0 0.0
    %1263 = vmatprep.subr.mxu0 0.0
    %1264 = vmatpush2.msra.mxu0 0.0
    %1265 = vmatprep.subr.mxu0 0.0
    %1266 = vmatpush2.msra.mxu0 0.0
    %1267 = vmatprep.subr.mxu0 0.0
    %1268 = vmatpush2.msra.mxu0 0.0
    %1269 = vmatprep.subr.mxu0 0.0
    %1270 = vmatpush2.msra.mxu0 0.0
    %1271 = vmatprep.subr.mxu0 0.0
    %1272 = vmatpush2.msra.mxu0 0.0
    %1273 = vmatprep.subr.mxu0 0.0
    %1274 = vmatpush2.msra.mxu0 0.0
    %1275 = vmatprep.subr.mxu0 0.0
    %1276 = vmatpush2.msra.mxu0 0.0
    %1277 = vmatprep.subr.mxu0 0.0
    %1278 = vmatpush2.msra.mxu0 0.0
    %1279 = vmatprep.subr.mxu0 0.0
    %1280 = vmatpush2.msra.mxu0 0.0
    %1281 = vmatprep.subr.mxu0 0.0
    %1282 = vmatpush2.msra.mxu0 0.0
    %1283 = vmatprep.subr.mxu0 0.0
    %1284 = vmatpush2.msra.mxu0 0.0
    %1285 = vmatprep.subr.mxu0 0.0
    %1286 = vmatpush2.msra.mxu0 0.0
    %1287 = vmatprep.mubr.f32.mxu0 0.0
    %1288 = vmatmul.mubr.f32.gmra.mxu0 %v1221
    %v1289 = vpop.f32.mrf.mxu0
    %v1290 = vadd.f32 0.0, %v1289
    %v1291 = vpop.f32.mrf.mxu0
    %1292 = vdwg.mxu0
    %v1293 = vadd.f32 %v1220, %v1290
    %v1294 = vmul.f32 %v1293, 0.5
    %v1295 = vsel %vm172, %v1293, %v1294
    %v1296 = vtanh.pop %v1295
    %v1297 = vmul.f32 %v1296, 0.5
    %v1298 = vadd.f32 %v1297, 0.5
    %v1299 = vsel %vm172, %v1296, %v1298
    %v1300 = vmul.f32 %v1299, %v1104
    %1302 = vrot.lane.b32.xlu0 %v1299, 64
    %v1303 = vpop.permute.xlu0 %1302
    %v1305 = vmul.f32 %v1299, %v1303
    %1307 = vrot.lane.b32.xlu0 %v1305, 32
    %v1308 = vpop.permute.xlu0 %1307
    %v1310 = vadd.f32 %v1300, %v1308
    %v1311 = vtanh.pop %v1310
    %1313 = vrot.lane.b32.xlu0 %v1311, 64
    %v1314 = vpop.permute.xlu0 %1313
    %v1316 = vmul.f32 %v1299, %v1314
    %1318 = vrot.lane.b32.xlu0 %v1316, 32
    %v1319 = vpop.permute.xlu0 %1318
    %1321 = vrot.lane.b32.xlu0 %v1214, 64
    %v1322 = vpop.permute.xlu0 %1321
    %v1324 = vsel %vm178, %v1319, %v1322
    %v1326 = vsel %vm289, %v1324, 0
    %1328 = vmatprep.subr.mxu0 0.0
    %1329 = vmatpush1.msra.mxu0 0.0
    %1330 = vmatprep.subr.mxu0 0.0
    %1331 = vmatpush1.msra.mxu0 0.0
    %1332 = vmatprep.subr.mxu0 0.0
    %1333 = vmatpush1.msra.mxu0 0.0
    %1334 = vmatprep.subr.mxu0 0.0
    %1335 = vmatpush1.msra.mxu0 0.0
    %1336 = vmatprep.subr.mxu0 0.0
    %1337 = vmatpush1.msra.mxu0 0.0
    %1338 = vmatprep.subr.mxu0 0.0
    %1339 = vmatpush1.msra.mxu0 0.0
    %1340 = vmatprep.subr.mxu0 0.0
    %1341 = vmatpush1.msra.mxu0 0.0
    %1342 = vmatprep.subr.mxu0 0.0
    %1343 = vmatpush1.msra.mxu0 0.0
    %1344 = vmatprep.subr.mxu0 0.0
    %1345 = vmatpush1.msra.mxu0 %v166
    %1346 = vmatprep.subr.mxu0 0.0
    %1347 = vmatpush1.msra.mxu0 %v165
    %1348 = vmatprep.subr.mxu0 0.0
    %1349 = vmatpush1.msra.mxu0 %v164
    %1350 = vmatprep.subr.mxu0 0.0
    %1351 = vmatpush1.msra.mxu0 %v163
    %1352 = vmatprep.subr.mxu0 0.0
    %1353 = vmatpush1.msra.mxu0 %v162
    %1354 = vmatprep.subr.mxu0 0.0
    %1355 = vmatpush1.msra.mxu0 %v161
    %1356 = vmatprep.subr.mxu0 0.0
    %1357 = vmatpush1.msra.mxu0 %v160
    %1358 = vmatprep.subr.mxu0 0.0
    %1359 = vmatpush1.msra.mxu0 %v159
    %1360 = vmatprep.subr.mxu0 0.0
    %1361 = vmatpush2.msra.mxu0 0.0
    %1362 = vmatprep.subr.mxu0 0.0
    %1363 = vmatpush2.msra.mxu0 0.0
    %1364 = vmatprep.subr.mxu0 0.0
    %1365 = vmatpush2.msra.mxu0 0.0
    %1366 = vmatprep.subr.mxu0 0.0
    %1367 = vmatpush2.msra.mxu0 0.0
    %1368 = vmatprep.subr.mxu0 0.0
    %1369 = vmatpush2.msra.mxu0 0.0
    %1370 = vmatprep.subr.mxu0 0.0
    %1371 = vmatpush2.msra.mxu0 0.0
    %1372 = vmatprep.subr.mxu0 0.0
    %1373 = vmatpush2.msra.mxu0 0.0
    %1374 = vmatprep.subr.mxu0 0.0
    %1375 = vmatpush2.msra.mxu0 0.0
    %1376 = vmatprep.subr.mxu0 0.0
    %1377 = vmatpush2.msra.mxu0 0.0
    %1378 = vmatprep.subr.mxu0 0.0
    %1379 = vmatpush2.msra.mxu0 0.0
    %1380 = vmatprep.subr.mxu0 0.0
    %1381 = vmatpush2.msra.mxu0 0.0
    %1382 = vmatprep.subr.mxu0 0.0
    %1383 = vmatpush2.msra.mxu0 0.0
    %1384 = vmatprep.subr.mxu0 0.0
    %1385 = vmatpush2.msra.mxu0 0.0
    %1386 = vmatprep.subr.mxu0 0.0
    %1387 = vmatpush2.msra.mxu0 0.0
    %1388 = vmatprep.subr.mxu0 0.0
    %1389 = vmatpush2.msra.mxu0 0.0
    %1390 = vmatprep.subr.mxu0 0.0
    %1391 = vmatpush2.msra.mxu0 0.0
    %1392 = vmatprep.mubr.f32.mxu0 0.0
    %1393 = vmatmul.mubr.f32.gmra.mxu0 %v1326
    %v1394 = vpop.f32.mrf.mxu0
    %v1395 = vadd.f32 %v167, %v1394
    %v1396 = vpop.f32.mrf.mxu0
    %1397 = vdwg.mxu0
    %v1398 = vmul.f32 %v1395, 0.5
    %v1399 = vsel %vm172, %v1395, %v1398
    %v1400 = vtanh.pop %v1399
    %v1401 = vmul.f32 %v1400, 0.5
    %v1402 = vadd.f32 %v1401, 0.5
    %v1403 = vsel %vm172, %v1400, %v1402
    %v1404 = vmul.f32 %v1403, %v1208
    %1406 = vrot.lane.b32.xlu0 %v1403, 64
    %v1407 = vpop.permute.xlu0 %1406
    %v1409 = vmul.f32 %v1403, %v1407
    %1411 = vrot.lane.b32.xlu0 %v1409, 32
    %v1412 = vpop.permute.xlu0 %1411
    %v1414 = vadd.f32 %v1404, %v1412
    %v1415 = vtanh.pop %v1414
    %1417 = vrot.lane.b32.xlu0 %v1415, 64
    %v1418 = vpop.permute.xlu0 %1417
    %v1420 = vmul.f32 %v1403, %v1418
    %1422 = vrot.lane.b32.xlu0 %v1420, 32
    %v1423 = vpop.permute.xlu0 %1422
    %1425 = vst.msk [vmem:[#allocation3 + $0x5] sm:$0x1] %vm394, %v1423
    %v1426 = vld [vmem:[#allocation2 + $0x6] sm:$0x1]
    %v1427 = vsel %vm178, %v1319, 0
    %1429 = vmatprep.subr.mxu0 0.0
    %1430 = vmatpush1.msra.mxu0 0.0
    %1431 = vmatprep.subr.mxu0 0.0
    %1432 = vmatpush1.msra.mxu0 0.0
    %1433 = vmatprep.subr.mxu0 0.0
    %1434 = vmatpush1.msra.mxu0 0.0
    %1435 = vmatprep.subr.mxu0 0.0
    %1436 = vmatpush1.msra.mxu0 0.0
    %1437 = vmatprep.subr.mxu0 0.0
    %1438 = vmatpush1.msra.mxu0 0.0
    %1439 = vmatprep.subr.mxu0 0.0
    %1440 = vmatpush1.msra.mxu0 0.0
    %1441 = vmatprep.subr.mxu0 0.0
    %1442 = vmatpush1.msra.mxu0 0.0
    %1443 = vmatprep.subr.mxu0 0.0
    %1444 = vmatpush1.msra.mxu0 0.0
    %1445 = vmatprep.subr.mxu0 0.0
    %1446 = vmatpush1.msra.mxu0 0.0
    %1447 = vmatprep.subr.mxu0 0.0
    %1448 = vmatpush1.msra.mxu0 0.0
    %1449 = vmatprep.subr.mxu0 0.0
    %1450 = vmatpush1.msra.mxu0 0.0
    %1451 = vmatprep.subr.mxu0 0.0
    %1452 = vmatpush1.msra.mxu0 0.0
    %1453 = vmatprep.subr.mxu0 0.0
    %1454 = vmatpush1.msra.mxu0 %v158
    %1455 = vmatprep.subr.mxu0 0.0
    %1456 = vmatpush1.msra.mxu0 %v157
    %1457 = vmatprep.subr.mxu0 0.0
    %1458 = vmatpush1.msra.mxu0 %v156
    %1459 = vmatprep.subr.mxu0 0.0
    %1460 = vmatpush1.msra.mxu0 %v155
    %1461 = vmatprep.subr.mxu0 0.0
    %1462 = vmatpush2.msra.mxu0 0.0
    %1463 = vmatprep.subr.mxu0 0.0
    %1464 = vmatpush2.msra.mxu0 0.0
    %1465 = vmatprep.subr.mxu0 0.0
    %1466 = vmatpush2.msra.mxu0 0.0
    %1467 = vmatprep.subr.mxu0 0.0
    %1468 = vmatpush2.msra.mxu0 0.0
    %1469 = vmatprep.subr.mxu0 0.0
    %1470 = vmatpush2.msra.mxu0 0.0
    %1471 = vmatprep.subr.mxu0 0.0
    %1472 = vmatpush2.msra.mxu0 0.0
    %1473 = vmatprep.subr.mxu0 0.0
    %1474 = vmatpush2.msra.mxu0 0.0
    %1475 = vmatprep.subr.mxu0 0.0
    %1476 = vmatpush2.msra.mxu0 0.0
    %1477 = vmatprep.subr.mxu0 0.0
    %1478 = vmatpush2.msra.mxu0 0.0
    %1479 = vmatprep.subr.mxu0 0.0
    %1480 = vmatpush2.msra.mxu0 0.0
    %1481 = vmatprep.subr.mxu0 0.0
    %1482 = vmatpush2.msra.mxu0 0.0
    %1483 = vmatprep.subr.mxu0 0.0
    %1484 = vmatpush2.msra.mxu0 0.0
    %1485 = vmatprep.subr.mxu0 0.0
    %1486 = vmatpush2.msra.mxu0 0.0
    %1487 = vmatprep.subr.mxu0 0.0
    %1488 = vmatpush2.msra.mxu0 0.0
    %1489 = vmatprep.subr.mxu0 0.0
    %1490 = vmatpush2.msra.mxu0 0.0
    %1491 = vmatprep.subr.mxu0 0.0
    %1492 = vmatpush2.msra.mxu0 0.0
    %1493 = vmatprep.mubr.f32.mxu0 0.0
    %1494 = vmatmul.mubr.f32.gmra.mxu0 %v1427
    %v1495 = vpop.f32.mrf.mxu0
    %v1496 = vadd.f32 0.0, %v1495
    %v1497 = vpop.f32.mrf.mxu0
    %1498 = vdwg.mxu0
    %v1499 = vadd.f32 %v1426, %v1496
    %v1500 = vmul.f32 %v1499, 0.5
    %v1501 = vsel %vm172, %v1499, %v1500
    %v1502 = vtanh.pop %v1501
    %v1503 = vmul.f32 %v1502, 0.5
    %v1504 = vadd.f32 %v1503, 0.5
    %v1505 = vsel %vm172, %v1502, %v1504
    %v1506 = vmul.f32 %v1505, %v1310
    %1508 = vrot.lane.b32.xlu0 %v1505, 64
    %v1509 = vpop.permute.xlu0 %1508
    %v1511 = vmul.f32 %v1505, %v1509
    %1513 = vrot.lane.b32.xlu0 %v1511, 32
    %v1514 = vpop.permute.xlu0 %1513
    %v1516 = vadd.f32 %v1506, %v1514
    %v1517 = vtanh.pop %v1516
    %1519 = vrot.lane.b32.xlu0 %v1517, 64
    %v1520 = vpop.permute.xlu0 %1519
    %v1522 = vmul.f32 %v1505, %v1520
    %1524 = vrot.lane.b32.xlu0 %v1522, 32
    %v1525 = vpop.permute.xlu0 %1524
    %1527 = vrot.lane.b32.xlu0 %v1420, 64
    %v1528 = vpop.permute.xlu0 %1527
    %v1530 = vsel %vm178, %v1525, %v1528
    %v1532 = vsel %vm289, %v1530, 0
    %1534 = vmatprep.subr.mxu0 0.0
    %1535 = vmatpush1.msra.mxu0 0.0
    %1536 = vmatprep.subr.mxu0 0.0
    %1537 = vmatpush1.msra.mxu0 0.0
    %1538 = vmatprep.subr.mxu0 0.0
    %1539 = vmatpush1.msra.mxu0 0.0
    %1540 = vmatprep.subr.mxu0 0.0
    %1541 = vmatpush1.msra.mxu0 0.0
    %1542 = vmatprep.subr.mxu0 0.0
    %1543 = vmatpush1.msra.mxu0 0.0
    %1544 = vmatprep.subr.mxu0 0.0
    %1545 = vmatpush1.msra.mxu0 0.0
    %1546 = vmatprep.subr.mxu0 0.0
    %1547 = vmatpush1.msra.mxu0 0.0
    %1548 = vmatprep.subr.mxu0 0.0
    %1549 = vmatpush1.msra.mxu0 0.0
    %1550 = vmatprep.subr.mxu0 0.0
    %1551 = vmatpush1.msra.mxu0 %v166
    %1552 = vmatprep.subr.mxu0 0.0
    %1553 = vmatpush1.msra.mxu0 %v165
    %1554 = vmatprep.subr.mxu0 0.0
    %1555 = vmatpush1.msra.mxu0 %v164
    %1556 = vmatprep.subr.mxu0 0.0
    %1557 = vmatpush1.msra.mxu0 %v163
    %1558 = vmatprep.subr.mxu0 0.0
    %1559 = vmatpush1.msra.mxu0 %v162
    %1560 = vmatprep.subr.mxu0 0.0
    %1561 = vmatpush1.msra.mxu0 %v161
    %1562 = vmatprep.subr.mxu0 0.0
    %1563 = vmatpush1.msra.mxu0 %v160
    %1564 = vmatprep.subr.mxu0 0.0
    %1565 = vmatpush1.msra.mxu0 %v159
    %1566 = vmatprep.subr.mxu0 0.0
    %1567 = vmatpush2.msra.mxu0 0.0
    %1568 = vmatprep.subr.mxu0 0.0
    %1569 = vmatpush2.msra.mxu0 0.0
    %1570 = vmatprep.subr.mxu0 0.0
    %1571 = vmatpush2.msra.mxu0 0.0
    %1572 = vmatprep.subr.mxu0 0.0
    %1573 = vmatpush2.msra.mxu0 0.0
    %1574 = vmatprep.subr.mxu0 0.0
    %1575 = vmatpush2.msra.mxu0 0.0
    %1576 = vmatprep.subr.mxu0 0.0
    %1577 = vmatpush2.msra.mxu0 0.0
    %1578 = vmatprep.subr.mxu0 0.0
    %1579 = vmatpush2.msra.mxu0 0.0
    %1580 = vmatprep.subr.mxu0 0.0
    %1581 = vmatpush2.msra.mxu0 0.0
    %1582 = vmatprep.subr.mxu0 0.0
    %1583 = vmatpush2.msra.mxu0 0.0
    %1584 = vmatprep.subr.mxu0 0.0
    %1585 = vmatpush2.msra.mxu0 0.0
    %1586 = vmatprep.subr.mxu0 0.0
    %1587 = vmatpush2.msra.mxu0 0.0
    %1588 = vmatprep.subr.mxu0 0.0
    %1589 = vmatpush2.msra.mxu0 0.0
    %1590 = vmatprep.subr.mxu0 0.0
    %1591 = vmatpush2.msra.mxu0 0.0
    %1592 = vmatprep.subr.mxu0 0.0
    %1593 = vmatpush2.msra.mxu0 0.0
    %1594 = vmatprep.subr.mxu0 0.0
    %1595 = vmatpush2.msra.mxu0 0.0
    %1596 = vmatprep.subr.mxu0 0.0
    %1597 = vmatpush2.msra.mxu0 0.0
    %1598 = vmatprep.mubr.f32.mxu0 0.0
    %1599 = vmatmul.mubr.f32.gmra.mxu0 %v1532
    %v1600 = vpop.f32.mrf.mxu0
    %v1601 = vadd.f32 %v167, %v1600
    %v1602 = vpop.f32.mrf.mxu0
    %1603 = vdwg.mxu0
    %v1604 = vmul.f32 %v1601, 0.5
    %v1605 = vsel %vm172, %v1601, %v1604
    %v1606 = vtanh.pop %v1605
    %v1607 = vmul.f32 %v1606, 0.5
    %v1608 = vadd.f32 %v1607, 0.5
    %v1609 = vsel %vm172, %v1606, %v1608
    %v1610 = vmul.f32 %v1609, %v1414
    %1612 = vrot.lane.b32.xlu0 %v1609, 64
    %v1613 = vpop.permute.xlu0 %1612
    %v1615 = vmul.f32 %v1609, %v1613
    %1617 = vrot.lane.b32.xlu0 %v1615, 32
    %v1618 = vpop.permute.xlu0 %1617
    %v1620 = vadd.f32 %v1610, %v1618
    %v1621 = vtanh.pop %v1620
    %1623 = vrot.lane.b32.xlu0 %v1621, 64
    %v1624 = vpop.permute.xlu0 %1623
    %v1626 = vmul.f32 %v1609, %v1624
    %1628 = vrot.lane.b32.xlu0 %v1626, 32
    %v1629 = vpop.permute.xlu0 %1628
    %1631 = vst.msk [vmem:[#allocation3 + $0x6] sm:$0x1] %vm394, %v1629
    %v1632 = vld [vmem:[#allocation2 + $0x7] sm:$0x1]
    %v1633 = vsel %vm178, %v1525, 0
    %1635 = vmatprep.subr.mxu0 0.0
    %1636 = vmatpush1.msra.mxu0 0.0
    %1637 = vmatprep.subr.mxu0 0.0
    %1638 = vmatpush1.msra.mxu0 0.0
    %1639 = vmatprep.subr.mxu0 0.0
    %1640 = vmatpush1.msra.mxu0 0.0
    %1641 = vmatprep.subr.mxu0 0.0
    %1642 = vmatpush1.msra.mxu0 0.0
    %1643 = vmatprep.subr.mxu0 0.0
    %1644 = vmatpush1.msra.mxu0 0.0
    %1645 = vmatprep.subr.mxu0 0.0
    %1646 = vmatpush1.msra.mxu0 0.0
    %1647 = vmatprep.subr.mxu0 0.0
    %1648 = vmatpush1.msra.mxu0 0.0
    %1649 = vmatprep.subr.mxu0 0.0
    %1650 = vmatpush1.msra.mxu0 0.0
    %1651 = vmatprep.subr.mxu0 0.0
    %1652 = vmatpush1.msra.mxu0 0.0
    %1653 = vmatprep.subr.mxu0 0.0
    %1654 = vmatpush1.msra.mxu0 0.0
    %1655 = vmatprep.subr.mxu0 0.0
    %1656 = vmatpush1.msra.mxu0 0.0
    %1657 = vmatprep.subr.mxu0 0.0
    %1658 = vmatpush1.msra.mxu0 0.0
    %1659 = vmatprep.subr.mxu0 0.0
    %1660 = vmatpush1.msra.mxu0 %v158
    %1661 = vmatprep.subr.mxu0 0.0
    %1662 = vmatpush1.msra.mxu0 %v157
    %1663 = vmatprep.subr.mxu0 0.0
    %1664 = vmatpush1.msra.mxu0 %v156
    %1665 = vmatprep.subr.mxu0 0.0
    %1666 = vmatpush1.msra.mxu0 %v155
    %1667 = vmatprep.subr.mxu0 0.0
    %1668 = vmatpush2.msra.mxu0 0.0
    %1669 = vmatprep.subr.mxu0 0.0
    %1670 = vmatpush2.msra.mxu0 0.0
    %1671 = vmatprep.subr.mxu0 0.0
    %1672 = vmatpush2.msra.mxu0 0.0
    %1673 = vmatprep.subr.mxu0 0.0
    %1674 = vmatpush2.msra.mxu0 0.0
    %1675 = vmatprep.subr.mxu0 0.0
    %1676 = vmatpush2.msra.mxu0 0.0
    %1677 = vmatprep.subr.mxu0 0.0
    %1678 = vmatpush2.msra.mxu0 0.0
    %1679 = vmatprep.subr.mxu0 0.0
    %1680 = vmatpush2.msra.mxu0 0.0
    %1681 = vmatprep.subr.mxu0 0.0
    %1682 = vmatpush2.msra.mxu0 0.0
    %1683 = vmatprep.subr.mxu0 0.0
    %1684 = vmatpush2.msra.mxu0 0.0
    %1685 = vmatprep.subr.mxu0 0.0
    %1686 = vmatpush2.msra.mxu0 0.0
    %1687 = vmatprep.subr.mxu0 0.0
    %1688 = vmatpush2.msra.mxu0 0.0
    %1689 = vmatprep.subr.mxu0 0.0
    %1690 = vmatpush2.msra.mxu0 0.0
    %1691 = vmatprep.subr.mxu0 0.0
    %1692 = vmatpush2.msra.mxu0 0.0
    %1693 = vmatprep.subr.mxu0 0.0
    %1694 = vmatpush2.msra.mxu0 0.0
    %1695 = vmatprep.subr.mxu0 0.0
    %1696 = vmatpush2.msra.mxu0 0.0
    %1697 = vmatprep.subr.mxu0 0.0
    %1698 = vmatpush2.msra.mxu0 0.0
    %1699 = vmatprep.mubr.f32.mxu0 0.0
    %1700 = vmatmul.mubr.f32.gmra.mxu0 %v1633
    %v1701 = vpop.f32.mrf.mxu0
    %v1702 = vadd.f32 0.0, %v1701
    %v1703 = vpop.f32.mrf.mxu0
    %1704 = vdwg.mxu0
    %v1705 = vadd.f32 %v1632, %v1702
    %v1706 = vmul.f32 %v1705, 0.5
    %v1707 = vsel %vm172, %v1705, %v1706
    %v1708 = vtanh.pop %v1707
    %v1709 = vmul.f32 %v1708, 0.5
    %v1710 = vadd.f32 %v1709, 0.5
    %v1711 = vsel %vm172, %v1708, %v1710
    %v1712 = vmul.f32 %v1711, %v1516
    %1714 = vrot.lane.b32.xlu0 %v1711, 64
    %v1715 = vpop.permute.xlu0 %1714
    %v1717 = vmul.f32 %v1711, %v1715
    %1719 = vrot.lane.b32.xlu0 %v1717, 32
    %v1720 = vpop.permute.xlu0 %1719
    %v1722 = vadd.f32 %v1712, %v1720
    %v1723 = vtanh.pop %v1722
    %1725 = vrot.lane.b32.xlu0 %v1723, 64
    %v1726 = vpop.permute.xlu0 %1725
    %v1728 = vmul.f32 %v1711, %v1726
    %1730 = vrot.lane.b32.xlu0 %v1728, 32
    %v1731 = vpop.permute.xlu0 %1730
    %1733 = vrot.lane.b32.xlu0 %v1626, 64
    %v1734 = vpop.permute.xlu0 %1733
    %v1736 = vsel %vm178, %v1731, %v1734
    %v1738 = vsel %vm289, %v1736, 0
    %1740 = vmatprep.subr.mxu0 0.0
    %1741 = vmatpush1.msra.mxu0 0.0
    %1742 = vmatprep.subr.mxu0 0.0
    %1743 = vmatpush1.msra.mxu0 0.0
    %1744 = vmatprep.subr.mxu0 0.0
    %1745 = vmatpush1.msra.mxu0 0.0
    %1746 = vmatprep.subr.mxu0 0.0
    %1747 = vmatpush1.msra.mxu0 0.0
    %1748 = vmatprep.subr.mxu0 0.0
    %1749 = vmatpush1.msra.mxu0 0.0
    %1750 = vmatprep.subr.mxu0 0.0
    %1751 = vmatpush1.msra.mxu0 0.0
    %1752 = vmatprep.subr.mxu0 0.0
    %1753 = vmatpush1.msra.mxu0 0.0
    %1754 = vmatprep.subr.mxu0 0.0
    %1755 = vmatpush1.msra.mxu0 0.0
    %1756 = vmatprep.subr.mxu0 0.0
    %1757 = vmatpush1.msra.mxu0 %v166
    %1758 = vmatprep.subr.mxu0 0.0
    %1759 = vmatpush1.msra.mxu0 %v165
    %1760 = vmatprep.subr.mxu0 0.0
    %1761 = vmatpush1.msra.mxu0 %v164
    %1762 = vmatprep.subr.mxu0 0.0
    %1763 = vmatpush1.msra.mxu0 %v163
    %1764 = vmatprep.subr.mxu0 0.0
    %1765 = vmatpush1.msra.mxu0 %v162
    %1766 = vmatprep.subr.mxu0 0.0
    %1767 = vmatpush1.msra.mxu0 %v161
    %1768 = vmatprep.subr.mxu0 0.0
    %1769 = vmatpush1.msra.mxu0 %v160
    %1770 = vmatprep.subr.mxu0 0.0
    %1771 = vmatpush1.msra.mxu0 %v159
    %1772 = vmatprep.subr.mxu0 0.0
    %1773 = vmatpush2.msra.mxu0 0.0
    %1774 = vmatprep.subr.mxu0 0.0
    %1775 = vmatpush2.msra.mxu0 0.0
    %1776 = vmatprep.subr.mxu0 0.0
    %1777 = vmatpush2.msra.mxu0 0.0
    %1778 = vmatprep.subr.mxu0 0.0
    %1779 = vmatpush2.msra.mxu0 0.0
    %1780 = vmatprep.subr.mxu0 0.0
    %1781 = vmatpush2.msra.mxu0 0.0
    %1782 = vmatprep.subr.mxu0 0.0
    %1783 = vmatpush2.msra.mxu0 0.0
    %1784 = vmatprep.subr.mxu0 0.0
    %1785 = vmatpush2.msra.mxu0 0.0
    %1786 = vmatprep.subr.mxu0 0.0
    %1787 = vmatpush2.msra.mxu0 0.0
    %1788 = vmatprep.subr.mxu0 0.0
    %1789 = vmatpush2.msra.mxu0 0.0
    %1790 = vmatprep.subr.mxu0 0.0
    %1791 = vmatpush2.msra.mxu0 0.0
    %1792 = vmatprep.subr.mxu0 0.0
    %1793 = vmatpush2.msra.mxu0 0.0
    %1794 = vmatprep.subr.mxu0 0.0
    %1795 = vmatpush2.msra.mxu0 0.0
    %1796 = vmatprep.subr.mxu0 0.0
    %1797 = vmatpush2.msra.mxu0 0.0
    %1798 = vmatprep.subr.mxu0 0.0
    %1799 = vmatpush2.msra.mxu0 0.0
    %1800 = vmatprep.subr.mxu0 0.0
    %1801 = vmatpush2.msra.mxu0 0.0
    %1802 = vmatprep.subr.mxu0 0.0
    %1803 = vmatpush2.msra.mxu0 0.0
    %1804 = vmatprep.mubr.f32.mxu0 0.0
    %1805 = vmatmul.mubr.f32.gmra.mxu0 %v1738
    %v1806 = vpop.f32.mrf.mxu0
    %v1807 = vadd.f32 %v167, %v1806
    %v1808 = vpop.f32.mrf.mxu0
    %1809 = vdwg.mxu0
    %v1810 = vmul.f32 %v1807, 0.5
    %v1811 = vsel %vm172, %v1807, %v1810
    %v1812 = vtanh.pop %v1811
    %v1813 = vmul.f32 %v1812, 0.5
    %v1814 = vadd.f32 %v1813, 0.5
    %v1815 = vsel %vm172, %v1812, %v1814
    %v1816 = vmul.f32 %v1815, %v1620
    %1818 = vrot.lane.b32.xlu0 %v1815, 64
    %v1819 = vpop.permute.xlu0 %1818
    %v1821 = vmul.f32 %v1815, %v1819
    %1823 = vrot.lane.b32.xlu0 %v1821, 32
    %v1824 = vpop.permute.xlu0 %1823
    %v1826 = vadd.f32 %v1816, %v1824
    %v1827 = vtanh.pop %v1826
    %1829 = vrot.lane.b32.xlu0 %v1827, 64
    %v1830 = vpop.permute.xlu0 %1829
    %v1832 = vmul.f32 %v1815, %v1830
    %1834 = vrot.lane.b32.xlu0 %v1832, 32
    %v1835 = vpop.permute.xlu0 %1834
    %1837 = vst.msk [vmem:[#allocation3 + $0x7] sm:$0x1] %vm394, %v1835
    %1838 = vst.msk [vmem:[#allocation10] sm:$0x1] %vm394, %v1731
    %1839 = vst.msk [vmem:[#allocation10 + $0x1] sm:$0x1] %vm394, %v1835
    %1841 = vrot.lane.b32.xlu0 %v1722, 96
    %v1842 = vpop.permute.xlu0 %1841
    %1844 = vst.msk [vmem:[#allocation12] sm:$0x1] %vm394, %v1842
    %1846 = vrot.lane.b32.xlu0 %v1826, 96
    %v1847 = vpop.permute.xlu0 %1846
    %1849 = vst.msk [vmem:[#allocation12 + $0x1] sm:$0x1] %vm394, %v1847
    %v1850 = vld [vmem:[#allocation3] sm:$0xff]
    %v1851 = vld [vmem:[%s6] sm:$0xff]
    %v1852 = vld [vmem:[%s6 + $0x8] sm:$0xff]
    %v1853 = vld [vmem:[%s6 + $0x10] sm:$0xff]
    %v1854 = vld [vmem:[%s6 + $0x18] sm:$0xff]
    %v1855 = vld [vmem:[%s7] sm:$0x1]
    %v1857 = vlaneseq
    %v1858 = vshrl.u32 %v1857, 7
    %v1859 = vsub.s32 0, %v1858
    %v1860 = vrot.slane %v1855, %v1859
    %v1863 = vsel %vm178, %v1850, 0
    %1865 = vmatprep.subr.mxu0 0.0
    %1866 = vmatpush1.msra.mxu0 0.0
    %1867 = vmatprep.subr.mxu0 0.0
    %1868 = vmatpush1.msra.mxu0 0.0
    %1869 = vmatprep.subr.mxu0 0.0
    %1870 = vmatpush1.msra.mxu0 0.0
    %1871 = vmatprep.subr.mxu0 0.0
    %1872 = vmatpush1.msra.mxu0 0.0
    %1873 = vmatprep.subr.mxu0 0.0
    %1874 = vmatpush1.msra.mxu0 0.0
    %1875 = vmatprep.subr.mxu0 0.0
    %1876 = vmatpush1.msra.mxu0 0.0
    %1877 = vmatprep.subr.mxu0 0.0
    %1878 = vmatpush1.msra.mxu0 0.0
    %1879 = vmatprep.subr.mxu0 0.0
    %1880 = vmatpush1.msra.mxu0 0.0
    %1881 = vmatprep.subr.mxu0 0.0
    %1882 = vmatpush1.msra.mxu0 0.0
    %1883 = vmatprep.subr.mxu0 0.0
    %1884 = vmatpush1.msra.mxu0 0.0
    %1885 = vmatprep.subr.mxu0 0.0
    %1886 = vmatpush1.msra.mxu0 0.0
    %1887 = vmatprep.subr.mxu0 0.0
    %1888 = vmatpush1.msra.mxu0 0.0
    %1889 = vmatprep.subr.mxu0 0.0
    %1890 = vmatpush1.msra.mxu0 %v1854
    %1891 = vmatprep.subr.mxu0 0.0
    %1892 = vmatpush1.msra.mxu0 %v1853
    %1893 = vmatprep.subr.mxu0 0.0
    %1894 = vmatpush1.msra.mxu0 %v1852
    %1895 = vmatprep.subr.mxu0 0.0
    %1896 = vmatpush1.msra.mxu0 %v1851
    %1897 = vmatprep.subr.mxu0 0.0
    %1898 = vmatpush2.msra.mxu0 0.0
    %1899 = vmatprep.subr.mxu0 0.0
    %1900 = vmatpush2.msra.mxu0 0.0
    %1901 = vmatprep.subr.mxu0 0.0
    %1902 = vmatpush2.msra.mxu0 0.0
    %1903 = vmatprep.subr.mxu0 0.0
    %1904 = vmatpush2.msra.mxu0 0.0
    %1905 = vmatprep.subr.mxu0 0.0
    %1906 = vmatpush2.msra.mxu0 0.0
    %1907 = vmatprep.subr.mxu0 0.0
    %1908 = vmatpush2.msra.mxu0 0.0
    %1909 = vmatprep.subr.mxu0 0.0
    %1910 = vmatpush2.msra.mxu0 0.0
    %1911 = vmatprep.subr.mxu0 0.0
    %1912 = vmatpush2.msra.mxu0 0.0
    %1913 = vmatprep.subr.mxu0 0.0
    %1914 = vmatpush2.msra.mxu0 0.0
    %1915 = vmatprep.subr.mxu0 0.0
    %1916 = vmatpush2.msra.mxu0 0.0
    %1917 = vmatprep.subr.mxu0 0.0
    %1918 = vmatpush2.msra.mxu0 0.0
    %1919 = vmatprep.subr.mxu0 0.0
    %1920 = vmatpush2.msra.mxu0 0.0
    %1921 = vmatprep.subr.mxu0 0.0
    %1922 = vmatpush2.msra.mxu0 0.0
    %1923 = vmatprep.subr.mxu0 0.0
    %1924 = vmatpush2.msra.mxu0 0.0
    %1925 = vmatprep.subr.mxu0 0.0
    %1926 = vmatpush2.msra.mxu0 0.0
    %1927 = vmatprep.subr.mxu0 0.0
    %1928 = vmatpush2.msra.mxu0 0.0
    %1929 = vmatprep.mubr.f32.mxu0 0.0
    %1930 = vmatmul.mubr.f32.gmra.mxu0 %v1863
    %v1931 = vpop.f32.mrf.mxu0
    %v1932 = vadd.f32 %v1860, %v1931
    %v1933 = vpop.f32.mrf.mxu0
    %1934 = vdwg.mxu0
    %vm1935 = vcmask 80896
    %v1936 = vsel %vm1935, %v1932, -inf
    %1937 = vmax.xlane.f32.xlu0 %v1936
    %v1938 = vpop.xlane.xlu0 %1937
    %v1939 = vsub.f32 %v1932, %v1938
    %v1940 = vmul.f32 %v1939, 1.442695
    %v1941 = vpow.pop %v1940
    %v1942 = vsel %vm1935, %v1941, 0.0
    %1943 = vadd.xlane.f32.xlu0 %v1942
    %v1944 = vpop.xlane.xlu0 %1943
    %v1945 = vlog2.pop %v1944
    %v1946 = vmul.f32 %v1945, 0.6931472
    %v1947 = vsub.f32 %v1939, %v1946
    %1948 = vst.msk [vmem:[#allocation9] sm:$0xff] %vm1935, %v1947
    // Predicated region
    $region42: #{tpu_custom_call.1} parent=1 // pred_check
      _
    $region43: #{tpu_custom_call.1} parent=1 // pred_check_branch
      %1950 = sbr.rel (0) target = $region45
    $region44: #{tpu_custom_call.1} parent=1 // pred_region
      %s1952 = ssub.s32 128, 128
      %1953 = vsyncadd [#allocation6], %s1952
      %s1955 = sshll.u32 [#allocation9], 4
      %s1956 = int_to_ptr.vmem [resolvable:$true] %s1955
      %1958 = dma.vmem_to_hbm [thread:$0]  %s1956, 128, %s8, [#allocation6]
    $region45: #{tpu_custom_call.1} parent=1 // pred_fallthru
      _
    // Predicated region
    $region46: #{tpu_custom_call.1} parent=1 // pred_check
      _
    $region47: #{tpu_custom_call.1} parent=1 // pred_check_branch
      %1960 = sbr.rel (0) target = $region49
    $region48: #{tpu_custom_call.1} parent=1 // pred_region
      %s1962 = ssub.s32 32, 32
      %1963 = vsyncadd [#allocation11], %s1962
      %s1965 = sshll.u32 [#allocation10], 4
      %s1966 = int_to_ptr.vmem [resolvable:$true] %s1965
      %1968 = dma.vmem_to_hbm [thread:$0]  %s1966, 32, %s9, [#allocation11]
    $region49: #{tpu_custom_call.1} parent=1 // pred_fallthru
      _
    // Predicated region
    $region50: #{tpu_custom_call.1} parent=1 // pred_check
      _
    $region51: #{tpu_custom_call.1} parent=1 // pred_check_branch
      %1970 = sbr.rel (0) target = $region53
    $region52: #{tpu_custom_call.1} parent=1 // pred_region
      %s1972 = ssub.s32 32, 32
      %1973 = vsyncadd [#allocation11], %s1972
      %s1975 = sshll.u32 [#allocation12], 4
      %s1976 = int_to_ptr.vmem [resolvable:$true] %s1975
      %1978 = dma.vmem_to_hbm [thread:$0]  %s1976, 32, %s10, [#allocation11]
    $region53: #{tpu_custom_call.1} parent=1 // pred_fallthru
      _
    // Predicated region
    $region54: #{tpu_custom_call.1} parent=1 // pred_check
      _
    $region55: #{tpu_custom_call.1} parent=1 // pred_check_branch
      %1980 = sbr.rel (0) target = $region57
    $region56: #{tpu_custom_call.1} parent=1 // pred_region
      %1981 = dma.done [#allocation6], 128
    $region57: #{tpu_custom_call.1} parent=1 // pred_fallthru
      _
    // Predicated region
    $region58: #{tpu_custom_call.1} parent=1 // pred_check
      _
    $region59: #{tpu_custom_call.1} parent=1 // pred_check_branch
      %1983 = sbr.rel (0) target = $region61
    $region60: #{tpu_custom_call.1} parent=1 // pred_region
      %1984 = dma.done [#allocation11], 32
    $region61: #{tpu_custom_call.1} parent=1 // pred_fallthru
      _
    // Predicated region
    $region62: #{tpu_custom_call.1} parent=1 // pred_check
      _
    $region63: #{tpu_custom_call.1} parent=1 // pred_check_branch
      %1986 = sbr.rel (0) target = $region65
    $region64: #{tpu_custom_call.1} parent=1 // pred_region
      %1987 = dma.done [#allocation11], 32
    $region65: #{tpu_custom_call.1} parent=1 // pred_fallthru
      _
    %1988 = vsyncpa [#allocation5], 1
    %1989 = vsyncpa [#allocation8], 1
    %1990 = vsyncpa [#allocation6], 1
    %1991 = vsyncpa [#allocation11], 1

</llo_original>
